<compile_context>
chip_gen: v6e
topology: v6e:2x2x1
jax: 0.10.0
libtpu: 0.0.40
codegen_flags: <defaults>
</compile_context>

<pallas_src>
import functools

import jax
import jax.numpy as jnp
from jax.experimental import pallas as pl
from jax.experimental.pallas import tpu as pltpu


def _round_up(x, m):
    return ((x + m - 1) // m) * m


def _affine_coupling_kernel(
    z_ref,
    w_s_ref, b_s_ref,
    w_1_ref, b_1_ref,
    w_2_ref, b_2_ref,
    w_3_ref, b_3_ref,
    w_head_ref, b_head_ref,
    gamma_ref,
    z_out_ref, dlogdet_ref,
    *, n_split_at, n2, alpha,
):
    md = w_s_ref.dtype  # matmul operand dtype (f32 or bf16); accumulation is f32

    # Only z1 feeds the MLP -- keep its live range short (ends after the first dot)
    # and re-read the z block later at point of use instead of pinning TB-row vregs
    # across the whole body.
    z1 = z_ref[:, :n_split_at].astype(md)

    # ---- NN3 MLP (hot path: 5 matmuls + relus, all MXU/VPU) ----
    x = jnp.maximum(
        jnp.dot(z1, w_s_ref[...], preferred_element_type=jnp.float32) + b_s_ref[...], 0.0)
    x = jnp.maximum(
        jnp.dot(x.astype(md), w_1_ref[...], preferred_element_type=jnp.float32) + b_1_ref[...], 0.0)
    x = jnp.maximum(
        jnp.dot(x.astype(md), w_2_ref[...], preferred_element_type=jnp.float32) + b_2_ref[...], 0.0)
    x = jnp.maximum(
        jnp.dot(x.astype(md), w_3_ref[...], preferred_element_type=jnp.float32) + b_3_ref[...], 0.0)

    # Fused shift/scale head: one lane-denser matmul, then contiguous slices.
    head = jnp.dot(x.astype(md), w_head_ref[...],
                   preferred_element_type=jnp.float32) + b_head_ref[...]
    scale = alpha * jnp.tanh(head[:, n2:])          # == h[:, 1::2] of interleaved layout
    shift = gamma_ref[...] * jnp.tanh(head[:, :n2])  # == h[:, 0::2]; gamma precomputed

    # Read the z block at the point of use (pass-through z1 + z2 update).
    z_blk = z_ref[...].astype(jnp.float32)
    z2 = z_blk[:, n_split_at:]
    z2_new = z2 + scale * z2 + shift

    # One full-width store (single in-vreg lane select) instead of two masked
    # column stores hitting the same (8,128) tiles.
    z_out_ref[...] = jnp.concatenate(
        [z_blk[:, :n_split_at], z2_new], axis=1).astype(z_out_ref.dtype)

    # |scale| <= alpha = 0.6, so log1p is well-conditioned in f32.
    dlogdet_ref[...] = jnp.sum(jnp.log1p(scale), axis=1, keepdims=True)


def affine_coupling_forward(z, params, *, n_split_at, alpha=0.6,
                            block_rows=2048, use_bf16_matmul=False):
    """Forward (reverse=False) pass of affine_coupling with logdet contribution.

    z: (B, n_dim) float32. Returns (z_out (B, n_dim), dlogdet (B, 1)).
    """
    B, n_dim = z.shape
    n2 = n_dim - n_split_at

    (w_s, b_s, w_1, b_1, w_2, b_2, w_3, b_3, w_f, b_f, log_gamma) = params
    n_width = w_s.shape[0]

    w_dtype = jnp.bfloat16 if use_bf16_matmul else jnp.float32

    # PyTorch Linear: y = x @ W.T + b with W of shape (out, in). Pre-transpose.
    w_s_t = w_s.T.astype(w_dtype)          # (n_split_at, n_width)
    w_1_t = w_1.T.astype(w_dtype)
    w_2_t = w_2.T.astype(w_dtype)
    w_3_t = w_3.T.astype(w_dtype)
    w_f_t = w_f.T                           # (n_width, 2*n2), interleaved shift/scale cols

    # De-interleave final layer into blocked [shift | scale] head (single in-kernel matmul).
    w_head = jnp.concatenate([w_f_t[:, 0::2], w_f_t[:, 1::2]], axis=1).astype(w_dtype)
    b_head = jnp.concatenate([b_f[0::2], b_f[1::2]]).reshape(1, 2 * n2).astype(jnp.float32)

    b_s2 = b_s.reshape(1, n_width).astype(jnp.float32)
    b_12 = b_1.reshape(1, n_width).astype(jnp.float32)
    b_22 = b_2.reshape(1, n_width).astype(jnp.float32)
    b_32 = b_3.reshape(1, n_width).astype(jnp.float32)

    # Batch-independent: hoisted out of the kernel.
    gamma = jnp.exp(jnp.clip(log_gamma, -5.0, 5.0)).reshape(1, n2).astype(jnp.float32)

    # ---- Batch tiling ----
    # Large tile (step-overhead bound otherwise), multiple of 8 sublanes.
    TB = _round_up(min(block_rows, max(B, 8)), 8)
    # v7x megacore: keep >= 2 grid steps whenever the batch allows it (free on v5e/v6e).
    if B >= 16:
        TB = min(TB, _round_up((B + 1) // 2, 8))
    B_pad = _round_up(B, TB)
    if B_pad != B:
        z = jnp.pad(z, ((0, B_pad - B), (0, 0)))   # single pad; no pre-kernel column slices
    grid = (B_pad // TB,)

    def const_spec(shape):
        return pl.BlockSpec(shape, lambda i: (0, 0))   # fetch-once, VMEM-resident

    kernel = functools.partial(
        _affine_coupling_kernel, n_split_at=n_split_at, n2=n2, alpha=alpha)

    z_out, dlogdet = pl.pallas_call(
        kernel,
        out_shape=(
            jax.ShapeDtypeStruct((B_pad, n_dim), z.dtype),
            jax.ShapeDtypeStruct((B_pad, 1), jnp.float32),
        ),
        grid=grid,
        in_specs=[
            pl.BlockSpec((TB, n_dim), lambda i: (i, 0)),   # full z rows (split in-kernel)
            const_spec((n_split_at, n_width)),             # w_s
            const_spec((1, n_width)),                      # b_s
            const_spec((n_width, n_width)),                # w_1
            const_spec((1, n_width)),                      # b_1
            const_spec((n_width, n_width)),                # w_2
            const_spec((1, n_width)),                      # b_2
            const_spec((n_width, n_width)),                # w_3
            const_spec((1, n_width)),                      # b_3
            const_spec((n_width, 2 * n2)),                 # w_head = [w_shift | w_scale]
            const_spec((1, 2 * n2)),                       # b_head
            const_spec((1, n2)),                           # gamma
        ],
        out_specs=(
            pl.BlockSpec((TB, n_dim), lambda i: (i, 0)),
            pl.BlockSpec((TB, 1), lambda i: (i, 0)),
        ),
        compiler_params=pltpu.CompilerParams(
            dimension_semantics=("parallel",)),
    )(z, w_s_t, b_s2, w_1_t, b_12, w_2_t, b_22, w_3_t, b_32,
      w_head, b_head, gamma)

    if B_pad != B:
        z_out = z_out[:B]
        dlogdet = dlogdet[:B]
    return z_out, dlogdet


def init_params(key, n_dim, n_split_at, n_width=32):
    """Deterministic xavier-normal-like init matching NN3 shapes (flow_coupling=1)."""
    n_out = (n_dim - n_split_at) * 2

    def xavier(k, fan_out, fan_in):
        std = (2.0 / (fan_in + fan_out)) ** 0.5
        return std * jax.random.normal(k, (fan_out, fan_in), jnp.float32)

    ks = jax.random.split(key, 5)
    w_s = xavier(ks[0], n_width, n_split_at)
    w_1 = xavier(ks[1], n_width, n_width)
    w_2 = xavier(ks[2], n_width, n_width)
    w_3 = xavier(ks[3], n_width, n_width)
    w_f = xavier(ks[4], n_out, n_width)
    b_s = jnp.zeros((n_width,), jnp.float32)
    b_1 = jnp.zeros((n_width,), jnp.float32)
    b_2 = jnp.zeros((n_width,), jnp.float32)
    b_3 = jnp.zeros((n_width,), jnp.float32)
    b_f = jnp.zeros((n_out,), jnp.float32)
    log_gamma = jnp.zeros((1, n_dim - n_split_at), jnp.float32)
    return (w_s, b_s, w_1, b_1, w_2, b_2, w_3, b_3, w_f, b_f, log_gamma)


def reference_forward(z, params, *, n_split_at, alpha=0.6):
    """Pure-JAX reference mirroring the PyTorch forward (reverse=False)."""
    (w_s, b_s, w_1, b_1, w_2, b_2, w_3, b_3, w_f, b_f, log_gamma) = params
    z1 = z[:, :n_split_at]
    z2 = z[:, n_split_at:]
    x = jax.nn.relu(z1 @ w_s.T + b_s)
    x = jax.nn.relu(x @ w_1.T + b_1)
    x = jax.nn.relu(x @ w_2.T + b_2)
    x = jax.nn.relu(x @ w_3.T + b_3)
    h = x @ w_f.T + b_f
    shift = h[:, 0::2]
    scale = alpha * jnp.tanh(h[:, 1::2])
    shift = jnp.exp(jnp.clip(log_gamma, -5.0, 5.0)) * jnp.tanh(shift)
    z2_new = z2 + scale * z2 + shift
    dlogdet = jnp.sum(jnp.log(scale + 1.0), axis=1, keepdims=True)
    return jnp.concatenate([z1, z2_new], axis=1), dlogdet


if __name__ == "__main__":
    n_dim, n_split_at, n_width = 8, 4, 32
    key = jax.random.PRNGKey(0)
    k_param, k_in1, k_in2 = jax.random.split(key, 3)
    params = init_params(k_param, n_dim, n_split_at, n_width)

    # Case 1: default large tile, clamped to >=2 grid steps (B=512 -> TB=256, grid=(2,)).
    z = jax.random.normal(k_in1, (512, n_dim), jnp.float32)
    z_out, dlogdet = affine_coupling_forward(z, params, n_split_at=n_split_at)
    jax.block_until_ready((z_out, dlogdet))
    z_ref, dlogdet_ref = reference_forward(z, params, n_split_at=n_split_at)
    assert jnp.allclose(z_out, z_ref, atol=1e-5, rtol=1e-5), "z mismatch (B=512)"
    assert jnp.allclose(dlogdet, dlogdet_ref, atol=1e-5, rtol=1e-5), "dlogdet mismatch (B=512)"

    # Case 2: non-divisible batch exercises the padding path (B=100, TB clamped to 56).
    z_small = jax.random.normal(k_in2, (100, n_dim), jnp.float32)
    z_out2, dlogdet2 = affine_coupling_forward(
        z_small, params, n_split_at=n_split_at, block_rows=64)
    jax.block_until_ready((z_out2, dlogdet2))
    z_ref2, dlogdet_ref2 = reference_forward(z_small, params, n_split_at=n_split_at)
    assert jnp.allclose(z_out2, z_ref2, atol=1e-5, rtol=1e-5), "z mismatch (B=100)"
    assert jnp.allclose(dlogdet2, dlogdet_ref2, atol=1e-5, rtol=1e-5), "dlogdet mismatch (B=100)"

    # Case 3: bf16 matmul operands (MXU-native on v6e/v7x; dot-only, elementwise stays f32).
    z_out3, dlogdet3 = affine_coupling_forward(
        z, params, n_split_at=n_split_at, use_bf16_matmul=True)
    jax.block_until_ready((z_out3, dlogdet3))
    assert jnp.allclose(z_out3, z_ref, atol=1e-1, rtol=1e-1), "z mismatch (bf16)"
    assert jnp.allclose(dlogdet3, dlogdet_ref, atol=1e-1, rtol=1e-1), "dlogdet mismatch (bf16)"

    # TODO(synk): reverse=True path (inverse transform) not kernelized; only the
    # forward (reverse=False) pass with logdet is implemented here.
    print("KERNEL_OK")
</pallas_src>

<mosaic_0001>
module attributes {stable_mosaic.version = 11 : i64} {
  func.func @_affine_coupling_kernel(%arg0: i32, %arg1: memref<256x8xf32, #tpu.memory_space<vmem>>, %arg2: memref<4x32xf32, #tpu.memory_space<vmem>>, %arg3: memref<1x32xf32, #tpu.memory_space<vmem>>, %arg4: memref<32x32xf32, #tpu.memory_space<vmem>>, %arg5: memref<1x32xf32, #tpu.memory_space<vmem>>, %arg6: memref<32x32xf32, #tpu.memory_space<vmem>>, %arg7: memref<1x32xf32, #tpu.memory_space<vmem>>, %arg8: memref<32x32xf32, #tpu.memory_space<vmem>>, %arg9: memref<1x32xf32, #tpu.memory_space<vmem>>, %arg10: memref<32x8xf32, #tpu.memory_space<vmem>>, %arg11: memref<1x8xf32, #tpu.memory_space<vmem>>, %arg12: memref<1x4xf32, #tpu.memory_space<vmem>>, %arg13: memref<256x8xf32, #tpu.memory_space<vmem>>, %arg14: memref<256x1xf32, #tpu.memory_space<vmem>>) attributes {dimension_semantics = [#tpu.dimension_semantics<parallel>], iteration_bounds = array<i64: 2>, scalar_prefetch = 0 : i64, scratch_operands = 0 : i64, tpu.core_type = #tpu.core_type<tc>, window_params = [{transform_indices = @transform_0, window_bounds = array<i64: 256, 8>}, {pipeline_mode = #tpu.pipeline_mode<synchronous>, transform_indices = @transform_1, window_bounds = array<i64: 4, 32>}, {pipeline_mode = #tpu.pipeline_mode<synchronous>, transform_indices = @transform_2, window_bounds = array<i64: 1, 32>}, {pipeline_mode = #tpu.pipeline_mode<synchronous>, transform_indices = @transform_3, window_bounds = array<i64: 32, 32>}, {pipeline_mode = #tpu.pipeline_mode<synchronous>, transform_indices = @transform_4, window_bounds = array<i64: 1, 32>}, {pipeline_mode = #tpu.pipeline_mode<synchronous>, transform_indices = @transform_5, window_bounds = array<i64: 32, 32>}, {pipeline_mode = #tpu.pipeline_mode<synchronous>, transform_indices = @transform_6, window_bounds = array<i64: 1, 32>}, {pipeline_mode = #tpu.pipeline_mode<synchronous>, transform_indices = @transform_7, window_bounds = array<i64: 32, 32>}, {pipeline_mode = #tpu.pipeline_mode<synchronous>, transform_indices = @transform_8, window_bounds = array<i64: 1, 32>}, {pipeline_mode = #tpu.pipeline_mode<synchronous>, transform_indices = @transform_9, window_bounds = array<i64: 32, 8>}, {pipeline_mode = #tpu.pipeline_mode<synchronous>, transform_indices = @transform_10, window_bounds = array<i64: 1, 8>}, {pipeline_mode = #tpu.pipeline_mode<synchronous>, transform_indices = @transform_11, window_bounds = array<i64: 1, 4>}, {transform_indices = @transform_12, window_bounds = array<i64: 256, 8>}, {transform_indices = @transform_13, window_bounds = array<i64: 256, 1>}]} {
    %c0 = arith.constant 0 : index
    %c0_0 = arith.constant 0 : index
    %0 = vector.load %arg1[%c0, %c0_0] : memref<256x8xf32, #tpu.memory_space<vmem>>, vector<256x4xf32>
    %c0_1 = arith.constant 0 : index
    %c0_2 = arith.constant 0 : index
    %1 = vector.load %arg2[%c0_1, %c0_2] : memref<4x32xf32, #tpu.memory_space<vmem>>, vector<4x32xf32>
    %cst = arith.constant dense<0.000000e+00> : vector<256x32xf32>
    %2 = tpu.matmul %0, %1, %cst {dimension_numbers = #tpu.dot_dimension_numbers<[1], [0], [0], [1], [0, 0, 1, 1], [], []>} : vector<256x4xf32>, vector<4x32xf32>, vector<256x32xf32> -> vector<256x32xf32>
    %c0_3 = arith.constant 0 : index
    %c0_4 = arith.constant 0 : index
    %3 = vector.load %arg3[%c0_3, %c0_4] : memref<1x32xf32, #tpu.memory_space<vmem>>, vector<1x32xf32>
    %4 = vector.broadcast %3 : vector<1x32xf32> to vector<256x32xf32>
    %5 = arith.addf %2, %4 : vector<256x32xf32>
    %cst_5 = arith.constant 0.000000e+00 : f32
    %6 = vector.broadcast %cst_5 : f32 to vector<256x32xf32>
    %7 = arith.maximumf %5, %6 : vector<256x32xf32>
    %c0_6 = arith.constant 0 : index
    %c0_7 = arith.constant 0 : index
    %8 = vector.load %arg4[%c0_6, %c0_7] : memref<32x32xf32, #tpu.memory_space<vmem>>, vector<32x32xf32>
    %cst_8 = arith.constant dense<0.000000e+00> : vector<256x32xf32>
    %9 = tpu.matmul %7, %8, %cst_8 {dimension_numbers = #tpu.dot_dimension_numbers<[1], [0], [0], [1], [0, 0, 1, 1], [], []>} : vector<256x32xf32>, vector<32x32xf32>, vector<256x32xf32> -> vector<256x32xf32>
    %c0_9 = arith.constant 0 : index
    %c0_10 = arith.constant 0 : index
    %10 = vector.load %arg5[%c0_9, %c0_10] : memref<1x32xf32, #tpu.memory_space<vmem>>, vector<1x32xf32>
    %11 = vector.broadcast %10 : vector<1x32xf32> to vector<256x32xf32>
    %12 = arith.addf %9, %11 : vector<256x32xf32>
    %cst_11 = arith.constant 0.000000e+00 : f32
    %13 = vector.broadcast %cst_11 : f32 to vector<256x32xf32>
    %14 = arith.maximumf %12, %13 : vector<256x32xf32>
    %c0_12 = arith.constant 0 : index
    %c0_13 = arith.constant 0 : index
    %15 = vector.load %arg6[%c0_12, %c0_13] : memref<32x32xf32, #tpu.memory_space<vmem>>, vector<32x32xf32>
    %cst_14 = arith.constant dense<0.000000e+00> : vector<256x32xf32>
    %16 = tpu.matmul %14, %15, %cst_14 {dimension_numbers = #tpu.dot_dimension_numbers<[1], [0], [0], [1], [0, 0, 1, 1], [], []>} : vector<256x32xf32>, vector<32x32xf32>, vector<256x32xf32> -> vector<256x32xf32>
    %c0_15 = arith.constant 0 : index
    %c0_16 = arith.constant 0 : index
    %17 = vector.load %arg7[%c0_15, %c0_16] : memref<1x32xf32, #tpu.memory_space<vmem>>, vector<1x32xf32>
    %18 = vector.broadcast %17 : vector<1x32xf32> to vector<256x32xf32>
    %19 = arith.addf %16, %18 : vector<256x32xf32>
    %cst_17 = arith.constant 0.000000e+00 : f32
    %20 = vector.broadcast %cst_17 : f32 to vector<256x32xf32>
    %21 = arith.maximumf %19, %20 : vector<256x32xf32>
    %c0_18 = arith.constant 0 : index
    %c0_19 = arith.constant 0 : index
    %22 = vector.load %arg8[%c0_18, %c0_19] : memref<32x32xf32, #tpu.memory_space<vmem>>, vector<32x32xf32>
    %cst_20 = arith.constant dense<0.000000e+00> : vector<256x32xf32>
    %23 = tpu.matmul %21, %22, %cst_20 {dimension_numbers = #tpu.dot_dimension_numbers<[1], [0], [0], [1], [0, 0, 1, 1], [], []>} : vector<256x32xf32>, vector<32x32xf32>, vector<256x32xf32> -> vector<256x32xf32>
    %c0_21 = arith.constant 0 : index
    %c0_22 = arith.constant 0 : index
    %24 = vector.load %arg9[%c0_21, %c0_22] : memref<1x32xf32, #tpu.memory_space<vmem>>, vector<1x32xf32>
    %25 = vector.broadcast %24 : vector<1x32xf32> to vector<256x32xf32>
    %26 = arith.addf %23, %25 : vector<256x32xf32>
    %cst_23 = arith.constant 0.000000e+00 : f32
    %27 = vector.broadcast %cst_23 : f32 to vector<256x32xf32>
    %28 = arith.maximumf %26, %27 : vector<256x32xf32>
    %c0_24 = arith.constant 0 : index
    %c0_25 = arith.constant 0 : index
    %29 = vector.load %arg10[%c0_24, %c0_25] : memref<32x8xf32, #tpu.memory_space<vmem>>, vector<32x8xf32>
    %cst_26 = arith.constant dense<0.000000e+00> : vector<256x8xf32>
    %30 = tpu.matmul %28, %29, %cst_26 {dimension_numbers = #tpu.dot_dimension_numbers<[1], [0], [0], [1], [0, 0, 1, 1], [], []>} : vector<256x32xf32>, vector<32x8xf32>, vector<256x8xf32> -> vector<256x8xf32>
    %c0_27 = arith.constant 0 : index
    %c0_28 = arith.constant 0 : index
    %31 = vector.load %arg11[%c0_27, %c0_28] : memref<1x8xf32, #tpu.memory_space<vmem>>, vector<1x8xf32>
    %32 = vector.broadcast %31 : vector<1x8xf32> to vector<256x8xf32>
    %33 = arith.addf %30, %32 : vector<256x8xf32>
    %34 = vector.extract_strided_slice %33 {offsets = [0, 4], sizes = [256, 4], strides = [1, 1]} : vector<256x8xf32> to vector<256x4xf32>
    %35 = math.tanh %34 : vector<256x4xf32>
    %cst_29 = arith.constant 6.000000e-01 : f32
    %36 = vector.broadcast %cst_29 : f32 to vector<256x4xf32>
    %37 = arith.mulf %36, %35 : vector<256x4xf32>
    %c0_30 = arith.constant 0 : index
    %c0_31 = arith.constant 0 : index
    %38 = vector.load %arg12[%c0_30, %c0_31] : memref<1x4xf32, #tpu.memory_space<vmem>>, vector<1x4xf32>
    %39 = vector.extract_strided_slice %33 {offsets = [0, 0], sizes = [256, 4], strides = [1, 1]} : vector<256x8xf32> to vector<256x4xf32>
    %40 = math.tanh %39 : vector<256x4xf32>
    %41 = vector.broadcast %38 : vector<1x4xf32> to vector<256x4xf32>
    %42 = arith.mulf %41, %40 : vector<256x4xf32>
    %c0_32 = arith.constant 0 : index
    %c0_33 = arith.constant 0 : index
    %43 = vector.load %arg1[%c0_32, %c0_33] : memref<256x8xf32, #tpu.memory_space<vmem>>, vector<256x8xf32>
    %44 = vector.extract_strided_slice %43 {offsets = [0, 4], sizes = [256, 4], strides = [1, 1]} : vector<256x8xf32> to vector<256x4xf32>
    %45 = arith.mulf %37, %44 : vector<256x4xf32>
    %46 = arith.addf %44, %45 : vector<256x4xf32>
    %47 = arith.addf %46, %42 : vector<256x4xf32>
    %48 = vector.extract_strided_slice %43 {offsets = [0, 0], sizes = [256, 4], strides = [1, 1]} : vector<256x8xf32> to vector<256x4xf32>
    %49 = tpu.concatenate %48, %47 in 1 : vector<256x4xf32>, vector<256x4xf32> -> vector<256x8xf32>
    %c0_34 = arith.constant 0 : index
    %c0_35 = arith.constant 0 : index
    %50 = vector.load %arg13[%c0_34, %c0_35] : memref<256x8xf32, #tpu.memory_space<vmem>>, vector<256x8xf32>
    tpu.vector_store %arg13[%c0_34, %c0_35], %49 {strides = array<i32>} : memref<256x8xf32, #tpu.memory_space<vmem>>, vector<256x8xf32>,
    %51 = math.log1p %37 : vector<256x4xf32>
    %cst_36 = arith.constant dense<0.000000e+00> : vector<256xf32>
    %52 = vector.multi_reduction <add>, %51, %cst_36 [1] : vector<256x4xf32> to vector<256xf32>
    %53 = vector.shape_cast %52 : vector<256xf32> to vector<256x1xf32>
    %c0_37 = arith.constant 0 : index
    %c0_38 = arith.constant 0 : index
    %54 = vector.load %arg14[%c0_37, %c0_38] : memref<256x1xf32, #tpu.memory_space<vmem>>, vector<256x1xf32>
    tpu.vector_store %arg14[%c0_37, %c0_38], %53 {strides = array<i32>} : memref<256x1xf32, #tpu.memory_space<vmem>>, vector<256x1xf32>,
    return
  }
  func.func @transform_0(%arg0: i32) -> (i32, i32) {
    %c0_i32 = arith.constant 0 : i32
    %c0_i32_0 = arith.constant 0 : i32
    return %arg0, %c0_i32 : i32, i32
  }
  func.func @transform_1(%arg0: i32) -> (i32, i32) {
    %c0_i32 = arith.constant 0 : i32
    %c0_i32_0 = arith.constant 0 : i32
    %c0_i32_1 = arith.constant 0 : i32
    return %c0_i32, %c0_i32_0 : i32, i32
  }
  func.func @transform_2(%arg0: i32) -> (i32, i32) {
    %c0_i32 = arith.constant 0 : i32
    %c0_i32_0 = arith.constant 0 : i32
    %c0_i32_1 = arith.constant 0 : i32
    return %c0_i32, %c0_i32_0 : i32, i32
  }
  func.func @transform_3(%arg0: i32) -> (i32, i32) {
    %c0_i32 = arith.constant 0 : i32
    %c0_i32_0 = arith.constant 0 : i32
    %c0_i32_1 = arith.constant 0 : i32
    return %c0_i32, %c0_i32_0 : i32, i32
  }
  func.func @transform_4(%arg0: i32) -> (i32, i32) {
    %c0_i32 = arith.constant 0 : i32
    %c0_i32_0 = arith.constant 0 : i32
    %c0_i32_1 = arith.constant 0 : i32
    return %c0_i32, %c0_i32_0 : i32, i32
  }
  func.func @transform_5(%arg0: i32) -> (i32, i32) {
    %c0_i32 = arith.constant 0 : i32
    %c0_i32_0 = arith.constant 0 : i32
    %c0_i32_1 = arith.constant 0 : i32
    return %c0_i32, %c0_i32_0 : i32, i32
  }
  func.func @transform_6(%arg0: i32) -> (i32, i32) {
    %c0_i32 = arith.constant 0 : i32
    %c0_i32_0 = arith.constant 0 : i32
    %c0_i32_1 = arith.constant 0 : i32
    return %c0_i32, %c0_i32_0 : i32, i32
  }
  func.func @transform_7(%arg0: i32) -> (i32, i32) {
    %c0_i32 = arith.constant 0 : i32
    %c0_i32_0 = arith.constant 0 : i32
    %c0_i32_1 = arith.constant 0 : i32
    return %c0_i32, %c0_i32_0 : i32, i32
  }
  func.func @transform_8(%arg0: i32) -> (i32, i32) {
    %c0_i32 = arith.constant 0 : i32
    %c0_i32_0 = arith.constant 0 : i32
    %c0_i32_1 = arith.constant 0 : i32
    return %c0_i32, %c0_i32_0 : i32, i32
  }
  func.func @transform_9(%arg0: i32) -> (i32, i32) {
    %c0_i32 = arith.constant 0 : i32
    %c0_i32_0 = arith.constant 0 : i32
    %c0_i32_1 = arith.constant 0 : i32
    return %c0_i32, %c0_i32_0 : i32, i32
  }
  func.func @transform_10(%arg0: i32) -> (i32, i32) {
    %c0_i32 = arith.constant 0 : i32
    %c0_i32_0 = arith.constant 0 : i32
    %c0_i32_1 = arith.constant 0 : i32
    return %c0_i32, %c0_i32_0 : i32, i32
  }
  func.func @transform_11(%arg0: i32) -> (i32, i32) {
    %c0_i32 = arith.constant 0 : i32
    %c0_i32_0 = arith.constant 0 : i32
    %c0_i32_1 = arith.constant 0 : i32
    return %c0_i32, %c0_i32_0 : i32, i32
  }
  func.func @transform_12(%arg0: i32) -> (i32, i32) {
    %c0_i32 = arith.constant 0 : i32
    %c0_i32_0 = arith.constant 0 : i32
    return %arg0, %c0_i32 : i32, i32
  }
  func.func @transform_13(%arg0: i32) -> (i32, i32) {
    %c0_i32 = arith.constant 0 : i32
    %c0_i32_0 = arith.constant 0 : i32
    return %arg0, %c0_i32 : i32, i32
  }
}

</mosaic_0001>

<llo_original>
// kernel: tpu_custom_call.1
$region0: #{tpu_custom_call.1}
  #allocation0 [shape = 'u32[]', space=smem, size = 0x4, offset = 0x4, fixed_abs, tag = 'smem constant byte address 0x4 - core index']
  #allocation1 [shape = 'u32[144,128]{1,0:T(1,128)}', space=vmem, size = 0x12000, scoped, tag = 'internal scratch']
  %s0 = inlined_call_operand.vmem [shape: f32[512,8], index: 0, kind: input, shape index: {}]
  %s1 = inlined_call_operand.vmem [shape: f32[4,32], index: 1, kind: input, shape index: {}]
  %s2 = inlined_call_operand.vmem [shape: f32[1,32], index: 2, kind: input, shape index: {}]
  %s3 = inlined_call_operand.vmem [shape: f32[32,32], index: 3, kind: input, shape index: {}]
  %s4 = inlined_call_operand.vmem [shape: f32[1,32], index: 4, kind: input, shape index: {}]
  %s5 = inlined_call_operand.vmem [shape: f32[32,32], index: 5, kind: input, shape index: {}]
  %s6 = inlined_call_operand.vmem [shape: f32[1,32], index: 6, kind: input, shape index: {}]
  %s7 = inlined_call_operand.vmem [shape: f32[32,32], index: 7, kind: input, shape index: {}]
  %s8 = inlined_call_operand.vmem [shape: f32[1,32], index: 8, kind: input, shape index: {}]
  %s9 = inlined_call_operand.vmem [shape: f32[32,8], index: 9, kind: input, shape index: {}]
  %s10 = inlined_call_operand.vmem [shape: f32[1,8], index: 10, kind: input, shape index: {}]
  %s11 = inlined_call_operand.vmem [shape: f32[1,4], index: 11, kind: input, shape index: {}]
  %s12 = inlined_call_operand.vmem [shape: f32[512,8], index: 12, kind: output, shape index: {0}]
  %s13 = inlined_call_operand.vmem [shape: f32[512,1], index: 13, kind: output, shape index: {1}]
  %14 = xla_tuple %s12, %s13
  %s15 = sld [smem:[#allocation0]]
  $region89: #{tpu_custom_call.1} parent=0
    _
  %s17 = ssub.s32 1, %s15
  %s18 = scalar_select 0, %s17, %s15
  loop: start=0, step=1, limit=4
  $region2: #{tpu_custom_call.1} parent=0 // loop_pre_header
    _
  $region3: #{tpu_custom_call.1} parent=0 // loop_header
    %s20 = sphi 0, %s24
    %p21 = scmp.ge.s32.totalorder %s20, 4
    %s30 = sphi 0, %s32
    %s33 = sphi 0, %s30
    %s34 = sphi 0, %s33
    %s50 = sphi 0, %s34
    %s54 = sphi 0, %s54
    %s56 = sphi 0, %s54
    %s57 = sphi 0, %s56
    %s71 = sphi 0, %s57
    %s75 = sphi 0, %s75
    %s77 = sphi 0, %s75
    %s78 = sphi 0, %s77
    %s92 = sphi 0, %s78
    %s96 = sphi 0, %s96
    %s98 = sphi 0, %s96
    %s99 = sphi 0, %s98
    %s113 = sphi 0, %s99
    %s117 = sphi 0, %s117
    %s119 = sphi 0, %s117
    %s120 = sphi 0, %s119
    %s134 = sphi 0, %s120
    %s138 = sphi 0, %s138
    %s140 = sphi 0, %s138
    %s141 = sphi 0, %s140
    %s155 = sphi 0, %s141
    %s159 = sphi 0, %s159
    %s161 = sphi 0, %s159
    %s162 = sphi 0, %s161
    %s176 = sphi 0, %s162
    %s180 = sphi 0, %s180
    %s182 = sphi 0, %s180
    %s183 = sphi 0, %s182
    %s197 = sphi 0, %s183
    %s201 = sphi 0, %s201
    %s203 = sphi 0, %s201
    %s204 = sphi 0, %s203
    %s218 = sphi 0, %s204
    %s222 = sphi 0, %s222
    %s224 = sphi 0, %s222
    %s225 = sphi 0, %s224
    %s239 = sphi 0, %s225
    %s243 = sphi 0, %s243
    %s245 = sphi 0, %s243
    %s246 = sphi 0, %s245
    %s260 = sphi 0, %s246
    %s264 = sphi 0, %s264
    %s266 = sphi 0, %s264
    %s267 = sphi 0, %s266
    %s281 = sphi 0, %s267
    %s287 = sphi 0, %s289
    %s290 = sphi 0, %s287
    %s291 = sphi 0, %s290
    %s307 = sphi 0, %s291
    %s313 = sphi 0, %s315
    %s316 = sphi 0, %s313
    %s317 = sphi 0, %s316
    %s333 = sphi 0, %s317
  $region4: #{tpu_custom_call.1} parent=0 // loop_header_branch
    %23 = sbr.rel (%p21) target = $region8
  $region5: #{tpu_custom_call.1} parent=0 // loop_body
    %s25 = ssub.s32 %s20, 1
    %s26 = ssub.s32 %s20, 2
    %s27 = sadd.s32 %s20, 1
    %s28 = ssub.s32 %s20, %s27
    %p29 = scmp.eq.s32.totalorder %s28, 0
    %s31 = sadd.s32 %s30, 1
    %s32 = scalar_select %p29, %s30, %s31
    %p35 = pneg %p29
    %p36 = scmp.eq.s32.totalorder %s20, 1
    %p37 = por %p35, %p36
    %p38 = scmp.ne.s32.totalorder %s30, %s33
    %p39 = scmp.eq.s32.totalorder %s20, 0
    %p40 = por %p38, %p39
    %p41 = scmp.ne.s32.totalorder %s30, %s33
    %p42 = scmp.eq.s32.totalorder %s25, 1
    %p43 = por %p41, %p42
    %p44 = scmp.ne.s32.totalorder %s33, %s34
    %p45 = scmp.eq.s32.totalorder %s25, 0
    %p46 = por %p44, %p45
    %p47 = scmp.ne.s32.totalorder %s33, %s34
    %p48 = scmp.eq.s32.totalorder %s26, 1
    %p49 = por %p47, %p48
    %p51 = scmp.ne.s32.totalorder %s34, %s50
    %p52 = scmp.eq.s32.totalorder %s26, 0
    %p53 = por %p51, %p52
    %s55 = sadd.s32 %s54, 1
    %p58 = scmp.eq.s32.totalorder %s20, 1
    %p59 = scmp.ne.s32.totalorder %s54, %s56
    %p60 = scmp.eq.s32.totalorder %s20, 0
    %p61 = por %p59, %p60
    %p62 = scmp.ne.s32.totalorder %s54, %s56
    %p63 = scmp.eq.s32.totalorder %s25, 1
    %p64 = por %p62, %p63
    %p65 = scmp.ne.s32.totalorder %s56, %s57
    %p66 = scmp.eq.s32.totalorder %s25, 0
    %p67 = por %p65, %p66
    %p68 = scmp.ne.s32.totalorder %s56, %s57
    %p69 = scmp.eq.s32.totalorder %s26, 1
    %p70 = por %p68, %p69
    %p72 = scmp.ne.s32.totalorder %s57, %s71
    %p73 = scmp.eq.s32.totalorder %s26, 0
    %p74 = por %p72, %p73
    %s76 = sadd.s32 %s75, 1
    %p79 = scmp.eq.s32.totalorder %s20, 1
    %p80 = scmp.ne.s32.totalorder %s75, %s77
    %p81 = scmp.eq.s32.totalorder %s20, 0
    %p82 = por %p80, %p81
    %p83 = scmp.ne.s32.totalorder %s75, %s77
    %p84 = scmp.eq.s32.totalorder %s25, 1
    %p85 = por %p83, %p84
    %p86 = scmp.ne.s32.totalorder %s77, %s78
    %p87 = scmp.eq.s32.totalorder %s25, 0
    %p88 = por %p86, %p87
    %p89 = scmp.ne.s32.totalorder %s77, %s78
    %p90 = scmp.eq.s32.totalorder %s26, 1
    %p91 = por %p89, %p90
    %p93 = scmp.ne.s32.totalorder %s78, %s92
    %p94 = scmp.eq.s32.totalorder %s26, 0
    %p95 = por %p93, %p94
    %s97 = sadd.s32 %s96, 1
    %p100 = scmp.eq.s32.totalorder %s20, 1
    %p101 = scmp.ne.s32.totalorder %s96, %s98
    %p102 = scmp.eq.s32.totalorder %s20, 0
    %p103 = por %p101, %p102
    %p104 = scmp.ne.s32.totalorder %s96, %s98
    %p105 = scmp.eq.s32.totalorder %s25, 1
    %p106 = por %p104, %p105
    %p107 = scmp.ne.s32.totalorder %s98, %s99
    %p108 = scmp.eq.s32.totalorder %s25, 0
    %p109 = por %p107, %p108
    %p110 = scmp.ne.s32.totalorder %s98, %s99
    %p111 = scmp.eq.s32.totalorder %s26, 1
    %p112 = por %p110, %p111
    %p114 = scmp.ne.s32.totalorder %s99, %s113
    %p115 = scmp.eq.s32.totalorder %s26, 0
    %p116 = por %p114, %p115
    %s118 = sadd.s32 %s117, 1
    %p121 = scmp.eq.s32.totalorder %s20, 1
    %p122 = scmp.ne.s32.totalorder %s117, %s119
    %p123 = scmp.eq.s32.totalorder %s20, 0
    %p124 = por %p122, %p123
    %p125 = scmp.ne.s32.totalorder %s117, %s119
    %p126 = scmp.eq.s32.totalorder %s25, 1
    %p127 = por %p125, %p126
    %p128 = scmp.ne.s32.totalorder %s119, %s120
    %p129 = scmp.eq.s32.totalorder %s25, 0
    %p130 = por %p128, %p129
    %p131 = scmp.ne.s32.totalorder %s119, %s120
    %p132 = scmp.eq.s32.totalorder %s26, 1
    %p133 = por %p131, %p132
    %p135 = scmp.ne.s32.totalorder %s120, %s134
    %p136 = scmp.eq.s32.totalorder %s26, 0
    %p137 = por %p135, %p136
    %s139 = sadd.s32 %s138, 1
    %p142 = scmp.eq.s32.totalorder %s20, 1
    %p143 = scmp.ne.s32.totalorder %s138, %s140
    %p144 = scmp.eq.s32.totalorder %s20, 0
    %p145 = por %p143, %p144
    %p146 = scmp.ne.s32.totalorder %s138, %s140
    %p147 = scmp.eq.s32.totalorder %s25, 1
    %p148 = por %p146, %p147
    %p149 = scmp.ne.s32.totalorder %s140, %s141
    %p150 = scmp.eq.s32.totalorder %s25, 0
    %p151 = por %p149, %p150
    %p152 = scmp.ne.s32.totalorder %s140, %s141
    %p153 = scmp.eq.s32.totalorder %s26, 1
    %p154 = por %p152, %p153
    %p156 = scmp.ne.s32.totalorder %s141, %s155
    %p157 = scmp.eq.s32.totalorder %s26, 0
    %p158 = por %p156, %p157
    %s160 = sadd.s32 %s159, 1
    %p163 = scmp.eq.s32.totalorder %s20, 1
    %p164 = scmp.ne.s32.totalorder %s159, %s161
    %p165 = scmp.eq.s32.totalorder %s20, 0
    %p166 = por %p164, %p165
    %p167 = scmp.ne.s32.totalorder %s159, %s161
    %p168 = scmp.eq.s32.totalorder %s25, 1
    %p169 = por %p167, %p168
    %p170 = scmp.ne.s32.totalorder %s161, %s162
    %p171 = scmp.eq.s32.totalorder %s25, 0
    %p172 = por %p170, %p171
    %p173 = scmp.ne.s32.totalorder %s161, %s162
    %p174 = scmp.eq.s32.totalorder %s26, 1
    %p175 = por %p173, %p174
    %p177 = scmp.ne.s32.totalorder %s162, %s176
    %p178 = scmp.eq.s32.totalorder %s26, 0
    %p179 = por %p177, %p178
    %s181 = sadd.s32 %s180, 1
    %p184 = scmp.eq.s32.totalorder %s20, 1
    %p185 = scmp.ne.s32.totalorder %s180, %s182
    %p186 = scmp.eq.s32.totalorder %s20, 0
    %p187 = por %p185, %p186
    %p188 = scmp.ne.s32.totalorder %s180, %s182
    %p189 = scmp.eq.s32.totalorder %s25, 1
    %p190 = por %p188, %p189
    %p191 = scmp.ne.s32.totalorder %s182, %s183
    %p192 = scmp.eq.s32.totalorder %s25, 0
    %p193 = por %p191, %p192
    %p194 = scmp.ne.s32.totalorder %s182, %s183
    %p195 = scmp.eq.s32.totalorder %s26, 1
    %p196 = por %p194, %p195
    %p198 = scmp.ne.s32.totalorder %s183, %s197
    %p199 = scmp.eq.s32.totalorder %s26, 0
    %p200 = por %p198, %p199
    %s202 = sadd.s32 %s201, 1
    %p205 = scmp.eq.s32.totalorder %s20, 1
    %p206 = scmp.ne.s32.totalorder %s201, %s203
    %p207 = scmp.eq.s32.totalorder %s20, 0
    %p208 = por %p206, %p207
    %p209 = scmp.ne.s32.totalorder %s201, %s203
    %p210 = scmp.eq.s32.totalorder %s25, 1
    %p211 = por %p209, %p210
    %p212 = scmp.ne.s32.totalorder %s203, %s204
    %p213 = scmp.eq.s32.totalorder %s25, 0
    %p214 = por %p212, %p213
    %p215 = scmp.ne.s32.totalorder %s203, %s204
    %p216 = scmp.eq.s32.totalorder %s26, 1
    %p217 = por %p215, %p216
    %p219 = scmp.ne.s32.totalorder %s204, %s218
    %p220 = scmp.eq.s32.totalorder %s26, 0
    %p221 = por %p219, %p220
    %s223 = sadd.s32 %s222, 1
    %p226 = scmp.eq.s32.totalorder %s20, 1
    %p227 = scmp.ne.s32.totalorder %s222, %s224
    %p228 = scmp.eq.s32.totalorder %s20, 0
    %p229 = por %p227, %p228
    %p230 = scmp.ne.s32.totalorder %s222, %s224
    %p231 = scmp.eq.s32.totalorder %s25, 1
    %p232 = por %p230, %p231
    %p233 = scmp.ne.s32.totalorder %s224, %s225
    %p234 = scmp.eq.s32.totalorder %s25, 0
    %p235 = por %p233, %p234
    %p236 = scmp.ne.s32.totalorder %s224, %s225
    %p237 = scmp.eq.s32.totalorder %s26, 1
    %p238 = por %p236, %p237
    %p240 = scmp.ne.s32.totalorder %s225, %s239
    %p241 = scmp.eq.s32.totalorder %s26, 0
    %p242 = por %p240, %p241
    %s244 = sadd.s32 %s243, 1
    %p247 = scmp.eq.s32.totalorder %s20, 1
    %p248 = scmp.ne.s32.totalorder %s243, %s245
    %p249 = scmp.eq.s32.totalorder %s20, 0
    %p250 = por %p248, %p249
    %p251 = scmp.ne.s32.totalorder %s243, %s245
    %p252 = scmp.eq.s32.totalorder %s25, 1
    %p253 = por %p251, %p252
    %p254 = scmp.ne.s32.totalorder %s245, %s246
    %p255 = scmp.eq.s32.totalorder %s25, 0
    %p256 = por %p254, %p255
    %p257 = scmp.ne.s32.totalorder %s245, %s246
    %p258 = scmp.eq.s32.totalorder %s26, 1
    %p259 = por %p257, %p258
    %p261 = scmp.ne.s32.totalorder %s246, %s260
    %p262 = scmp.eq.s32.totalorder %s26, 0
    %p263 = por %p261, %p262
    %s265 = sadd.s32 %s264, 1
    %p268 = scmp.eq.s32.totalorder %s20, 1
    %p269 = scmp.ne.s32.totalorder %s264, %s266
    %p270 = scmp.eq.s32.totalorder %s20, 0
    %p271 = por %p269, %p270
    %p272 = scmp.ne.s32.totalorder %s264, %s266
    %p273 = scmp.eq.s32.totalorder %s25, 1
    %p274 = por %p272, %p273
    %p275 = scmp.ne.s32.totalorder %s266, %s267
    %p276 = scmp.eq.s32.totalorder %s25, 0
    %p277 = por %p275, %p276
    %p278 = scmp.ne.s32.totalorder %s266, %s267
    %p279 = scmp.eq.s32.totalorder %s26, 1
    %p280 = por %p278, %p279
    %p282 = scmp.ne.s32.totalorder %s267, %s281
    %p283 = scmp.eq.s32.totalorder %s26, 0
    %p284 = por %p282, %p283
    %s285 = ssub.s32 %s20, %s27
    %p286 = scmp.eq.s32.totalorder %s285, 0
    %s288 = sadd.s32 %s287, 1
    %s289 = scalar_select %p286, %s287, %s288
    %p292 = pneg %p286
    %p293 = scmp.eq.s32.totalorder %s20, 1
    %p294 = por %p292, %p293
    %p295 = scmp.ne.s32.totalorder %s287, %s290
    %p296 = scmp.eq.s32.totalorder %s20, 0
    %p297 = por %p295, %p296
    %p298 = scmp.ne.s32.totalorder %s287, %s290
    %p299 = scmp.eq.s32.totalorder %s25, 1
    %p300 = por %p298, %p299
    %p301 = scmp.ne.s32.totalorder %s290, %s291
    %p302 = scmp.eq.s32.totalorder %s25, 0
    %p303 = por %p301, %p302
    %p304 = scmp.ne.s32.totalorder %s290, %s291
    %p305 = scmp.eq.s32.totalorder %s26, 1
    %p306 = por %p304, %p305
    %p308 = scmp.ne.s32.totalorder %s291, %s307
    %p309 = scmp.eq.s32.totalorder %s26, 0
    %p310 = por %p308, %p309
    %s311 = ssub.s32 %s20, %s27
    %p312 = scmp.eq.s32.totalorder %s311, 0
    %s314 = sadd.s32 %s313, 1
    %s315 = scalar_select %p312, %s313, %s314
    %p318 = pneg %p312
    %p319 = scmp.eq.s32.totalorder %s20, 1
    %p320 = por %p318, %p319
    %p321 = scmp.ne.s32.totalorder %s313, %s316
    %p322 = scmp.eq.s32.totalorder %s20, 0
    %p323 = por %p321, %p322
    %p324 = scmp.ne.s32.totalorder %s313, %s316
    %p325 = scmp.eq.s32.totalorder %s25, 1
    %p326 = por %p324, %p325
    %p327 = scmp.ne.s32.totalorder %s316, %s317
    %p328 = scmp.eq.s32.totalorder %s25, 0
    %p329 = por %p327, %p328
    %p330 = scmp.ne.s32.totalorder %s316, %s317
    %p331 = scmp.eq.s32.totalorder %s26, 1
    %p332 = por %p330, %p331
    %p334 = scmp.ne.s32.totalorder %s317, %s333
    %p335 = scmp.eq.s32.totalorder %s26, 0
    %p336 = por %p334, %p335
    %p337 = scmp.le.s32.totalorder 1, %s20
    %p338 = scmp.lt.s32.totalorder %s20, 3
    %p339 = pnand %p337, %p338
    %p340 = pneg %p339
    // Predicated region
    $region9: #{tpu_custom_call.1} parent=5 // pred_check
      _
    $region10: #{tpu_custom_call.1} parent=5 // pred_check_branch
      %342 = sbr.rel (%p339) target = $region12
    $region11: #{tpu_custom_call.1} parent=5 // pred_region
      %s343 = ssub.s32 %s20, 1
      // Predicated region
      $region13: #{tpu_custom_call.1} parent=11 // pred_check
        %p344 = pneg %p67
      $region14: #{tpu_custom_call.1} parent=11 // pred_check_branch
        %346 = sbr.rel (%p344) target = $region16
      $region15: #{tpu_custom_call.1} parent=11 // pred_region
        _
      $region16: #{tpu_custom_call.1} parent=11 // pred_fallthru
        _
      // Predicated region
      $region17: #{tpu_custom_call.1} parent=11 // pred_check
        %p347 = pneg %p88
      $region18: #{tpu_custom_call.1} parent=11 // pred_check_branch
        %349 = sbr.rel (%p347) target = $region20
      $region19: #{tpu_custom_call.1} parent=11 // pred_region
        _
      $region20: #{tpu_custom_call.1} parent=11 // pred_fallthru
        _
      // Predicated region
      $region21: #{tpu_custom_call.1} parent=11 // pred_check
        %p350 = pneg %p109
      $region22: #{tpu_custom_call.1} parent=11 // pred_check_branch
        %352 = sbr.rel (%p350) target = $region24
      $region23: #{tpu_custom_call.1} parent=11 // pred_region
        _
      $region24: #{tpu_custom_call.1} parent=11 // pred_fallthru
        _
      // Predicated region
      $region25: #{tpu_custom_call.1} parent=11 // pred_check
        %p353 = pneg %p130
      $region26: #{tpu_custom_call.1} parent=11 // pred_check_branch
        %355 = sbr.rel (%p353) target = $region28
      $region27: #{tpu_custom_call.1} parent=11 // pred_region
        _
      $region28: #{tpu_custom_call.1} parent=11 // pred_fallthru
        _
      // Predicated region
      $region29: #{tpu_custom_call.1} parent=11 // pred_check
        %p356 = pneg %p151
      $region30: #{tpu_custom_call.1} parent=11 // pred_check_branch
        %358 = sbr.rel (%p356) target = $region32
      $region31: #{tpu_custom_call.1} parent=11 // pred_region
        _
      $region32: #{tpu_custom_call.1} parent=11 // pred_fallthru
        _
      // Predicated region
      $region33: #{tpu_custom_call.1} parent=11 // pred_check
        %p359 = pneg %p172
      $region34: #{tpu_custom_call.1} parent=11 // pred_check_branch
        %361 = sbr.rel (%p359) target = $region36
      $region35: #{tpu_custom_call.1} parent=11 // pred_region
        _
      $region36: #{tpu_custom_call.1} parent=11 // pred_fallthru
        _
      // Predicated region
      $region37: #{tpu_custom_call.1} parent=11 // pred_check
        %p362 = pneg %p193
      $region38: #{tpu_custom_call.1} parent=11 // pred_check_branch
        %364 = sbr.rel (%p362) target = $region40
      $region39: #{tpu_custom_call.1} parent=11 // pred_region
        _
      $region40: #{tpu_custom_call.1} parent=11 // pred_fallthru
        _
      // Predicated region
      $region41: #{tpu_custom_call.1} parent=11 // pred_check
        %p365 = pneg %p214
      $region42: #{tpu_custom_call.1} parent=11 // pred_check_branch
        %367 = sbr.rel (%p365) target = $region44
      $region43: #{tpu_custom_call.1} parent=11 // pred_region
        _
      $region44: #{tpu_custom_call.1} parent=11 // pred_fallthru
        _
      // Predicated region
      $region45: #{tpu_custom_call.1} parent=11 // pred_check
        %p368 = pneg %p235
      $region46: #{tpu_custom_call.1} parent=11 // pred_check_branch
        %370 = sbr.rel (%p368) target = $region48
      $region47: #{tpu_custom_call.1} parent=11 // pred_region
        _
      $region48: #{tpu_custom_call.1} parent=11 // pred_fallthru
        _
      // Predicated region
      $region49: #{tpu_custom_call.1} parent=11 // pred_check
        %p371 = pneg %p256
      $region50: #{tpu_custom_call.1} parent=11 // pred_check_branch
        %373 = sbr.rel (%p371) target = $region52
      $region51: #{tpu_custom_call.1} parent=11 // pred_region
        _
      $region52: #{tpu_custom_call.1} parent=11 // pred_fallthru
        _
      // Predicated region
      $region53: #{tpu_custom_call.1} parent=11 // pred_check
        %p374 = pneg %p277
      $region54: #{tpu_custom_call.1} parent=11 // pred_check_branch
        %376 = sbr.rel (%p374) target = $region56
      $region55: #{tpu_custom_call.1} parent=11 // pred_region
        _
      $region56: #{tpu_custom_call.1} parent=11 // pred_fallthru
        _
    $region12: #{tpu_custom_call.1} parent=5 // pred_fallthru
      _
    %p377 = scmp.lt.s32.totalorder %s20, 2
    // Predicated region
    $region57: #{tpu_custom_call.1} parent=5 // pred_check
      %p378 = pneg %p377
    $region58: #{tpu_custom_call.1} parent=5 // pred_check_branch
      %380 = sbr.rel (%p378) target = $region60
    $region59: #{tpu_custom_call.1} parent=5 // pred_region
      // Predicated region
      $region61: #{tpu_custom_call.1} parent=59 // pred_check
        %p381 = pneg %p40
      $region62: #{tpu_custom_call.1} parent=59 // pred_check_branch
        %383 = sbr.rel (%p381) target = $region64
      $region63: #{tpu_custom_call.1} parent=59 // pred_region
        %s384 = smul.u32 32, %s20
        %p385 = scmp.lt.s32.totalorder %s384, 63
        %s386 = scalar_select %p385, %s384, 63
        %s387 = smul.addr %s386, 8
        %s388 = scalar_lea.vmem %s0, %s387
        %s389 = smul.u32 32, %s20
      $region64: #{tpu_custom_call.1} parent=59 // pred_fallthru
        _
    $region60: #{tpu_custom_call.1} parent=5 // pred_fallthru
      _
    %p390 = scmp.le.s32.totalorder 1, %s20
    %p391 = scmp.lt.s32.totalorder %s20, 3
    %p392 = pnand %p390, %p391
    %p393 = pneg %p392
    // Predicated region
    $region65: #{tpu_custom_call.1} parent=5 // pred_check
      _
    $region66: #{tpu_custom_call.1} parent=5 // pred_check_branch
      %395 = sbr.rel (%p392) target = $region68
    $region67: #{tpu_custom_call.1} parent=5 // pred_region
      %s396 = ssub.s32 %s20, 1
      %s397 = smul.u32 32, %s25
      %p398 = scmp.lt.s32.totalorder %s397, 63
      %s399 = scalar_select %p398, %s397, 63
      %s400 = smul.addr %s399, 8
      %s401 = scalar_lea.vmem %s0, %s400
      %p402 = pneg %p46
      %p403 = pneg %p43
      %p404 = pneg %p67
      %p405 = pneg %p64
      %p406 = pneg %p88
      %p407 = pneg %p85
      %p408 = pneg %p109
      %p409 = pneg %p106
      %p410 = pneg %p130
      %p411 = pneg %p127
      %p412 = pneg %p151
      %p413 = pneg %p148
      %p414 = pneg %p172
      %p415 = pneg %p169
      %p416 = pneg %p193
      %p417 = pneg %p190
      %p418 = pneg %p214
      %p419 = pneg %p211
      %p420 = pneg %p235
      %p421 = pneg %p232
      %p422 = pneg %p256
      %p423 = pneg %p253
      %p424 = pneg %p277
      %p425 = pneg %p274
      %p426 = pneg %p303
      %p427 = pneg %p300
      %s428 = smul.u32 32, %s25
      %p429 = scmp.lt.s32.totalorder %s428, 63
      %s430 = scalar_select %p429, %s428, 63
      %s431 = smul.addr %s430, 8
      %s432 = scalar_lea.vmem %s12, %s431
      %p433 = pneg %p329
      %p434 = pneg %p326
      %s435 = smul.u32 32, %s25
      %p436 = scmp.lt.s32.totalorder %s435, 63
      %s437 = scalar_select %p436, %s435, 63
      %s438 = smul.addr %s437, 8
      %s439 = scalar_lea.vmem %s13, %s438
      %s440 = smul.u32 32, %s25
      %p441 = scmp.lt.s32.totalorder %s440, 63
      %s442 = scalar_select %p441, %s440, 63
      %s443 = smul.addr %s442, 8
      %s444 = scalar_lea.vmem %s0, %s443
      %s445 = smul.u32 32, %s25
      %s446 = smul.u32 32, %s25
      %p447 = scmp.lt.s32.totalorder %s446, 63
      %s448 = scalar_select %p447, %s446, 63
      %s449 = smul.addr %s448, 8
      %s450 = scalar_lea.vmem %s12, %s449
      %s451 = smul.u32 32, %s25
      %s452 = smul.u32 32, %s25
      %p453 = scmp.lt.s32.totalorder %s452, 63
      %s454 = scalar_select %p453, %s452, 63
      %s455 = smul.addr %s454, 8
      %s456 = scalar_lea.vmem %s13, %s455
      %s457 = smul.u32 32, %s25
      %v458 = vld [vmem:[%s444] sm:$0xff]
      %v459 = vld [vmem:[%s444 + $0x8] sm:$0xff]
      %v460 = vld [vmem:[%s444 + $0x10] sm:$0xff]
      %v461 = vld [vmem:[%s444 + $0x18] sm:$0xff]
      %v462 = vld [vmem:[%s444 + $0x20] sm:$0xff]
      %v463 = vld [vmem:[%s444 + $0x28] sm:$0xff]
      %v464 = vld [vmem:[%s444 + $0x30] sm:$0xff]
      %v465 = vld [vmem:[%s444 + $0x38] sm:$0xff]
      %v466 = vld [vmem:[%s444 + $0x40] sm:$0xff]
      %v467 = vld [vmem:[%s444 + $0x48] sm:$0xff]
      %v468 = vld [vmem:[%s444 + $0x50] sm:$0xff]
      %v469 = vld [vmem:[%s444 + $0x58] sm:$0xff]
      %v470 = vld [vmem:[%s444 + $0x60] sm:$0xff]
      %v471 = vld [vmem:[%s444 + $0x68] sm:$0xff]
      %v472 = vld [vmem:[%s444 + $0x70] sm:$0xff]
      %v473 = vld [vmem:[%s444 + $0x78] sm:$0xff]
      %v474 = vld [vmem:[%s444 + $0x80] sm:$0xff]
      %v475 = vld [vmem:[%s444 + $0x88] sm:$0xff]
      %v476 = vld [vmem:[%s444 + $0x90] sm:$0xff]
      %v477 = vld [vmem:[%s444 + $0x98] sm:$0xff]
      %v478 = vld [vmem:[%s444 + $0xa0] sm:$0xff]
      %v479 = vld [vmem:[%s444 + $0xa8] sm:$0xff]
      %v480 = vld [vmem:[%s444 + $0xb0] sm:$0xff]
      %v481 = vld [vmem:[%s444 + $0xb8] sm:$0xff]
      %v482 = vld [vmem:[%s444 + $0xc0] sm:$0xff]
      %v483 = vld [vmem:[%s444 + $0xc8] sm:$0xff]
      %v484 = vld [vmem:[%s444 + $0xd0] sm:$0xff]
      %v485 = vld [vmem:[%s444 + $0xd8] sm:$0xff]
      %v486 = vld [vmem:[%s444 + $0xe0] sm:$0xff]
      %v487 = vld [vmem:[%s444 + $0xe8] sm:$0xff]
      %v488 = vld [vmem:[%s444 + $0xf0] sm:$0xff]
      %v489 = vld [vmem:[%s444 + $0xf8] sm:$0xff]
      %v490 = vld [vmem:[%s1] sm:$0xf]
      %v491 = vld [vmem:[%s2] sm:$0x1]
      %v493 = vlaneseq
      %v494 = vshrl.u32 %v493, 7
      %v495 = vsub.s32 0, %v494
      %v496 = vrot.slane %v491, %v495
      %vm498 = vcmask 31744
      %v500 = vsel %vm498, %v458, 0
      %v503 = vsel %vm498, %v459, 0
      %v506 = vsel %vm498, %v460, 0
      %v509 = vsel %vm498, %v461, 0
      %v512 = vsel %vm498, %v462, 0
      %v515 = vsel %vm498, %v463, 0
      %v518 = vsel %vm498, %v464, 0
      %v521 = vsel %vm498, %v465, 0
      %v524 = vsel %vm498, %v466, 0
      %v527 = vsel %vm498, %v467, 0
      %v530 = vsel %vm498, %v468, 0
      %v533 = vsel %vm498, %v469, 0
      %v536 = vsel %vm498, %v470, 0
      %v539 = vsel %vm498, %v471, 0
      %v542 = vsel %vm498, %v472, 0
      %v545 = vsel %vm498, %v473, 0
      %v548 = vsel %vm498, %v474, 0
      %v551 = vsel %vm498, %v475, 0
      %v554 = vsel %vm498, %v476, 0
      %v557 = vsel %vm498, %v477, 0
      %v560 = vsel %vm498, %v478, 0
      %v563 = vsel %vm498, %v479, 0
      %v566 = vsel %vm498, %v480, 0
      %v569 = vsel %vm498, %v481, 0
      %v572 = vsel %vm498, %v482, 0
      %v575 = vsel %vm498, %v483, 0
      %v578 = vsel %vm498, %v484, 0
      %v581 = vsel %vm498, %v485, 0
      %v584 = vsel %vm498, %v486, 0
      %v587 = vsel %vm498, %v487, 0
      %v590 = vsel %vm498, %v488, 0
      %v593 = vsel %vm498, %v489, 0
      %vm595 = vcmask 1043456
      %v597 = vsel %vm595, %v490, 0
      %599 = vmatprep.subr.mxu0 0.0
      %600 = vmatpush1.msra.mxu0 0.0
      %601 = vmatprep.subr.mxu0 0.0
      %602 = vmatpush1.msra.mxu0 0.0
      %603 = vmatprep.subr.mxu0 0.0
      %604 = vmatpush1.msra.mxu0 0.0
      %605 = vmatprep.subr.mxu0 0.0
      %606 = vmatpush1.msra.mxu0 0.0
      %607 = vmatprep.subr.mxu0 0.0
      %608 = vmatpush1.msra.mxu0 0.0
      %609 = vmatprep.subr.mxu0 0.0
      %610 = vmatpush1.msra.mxu0 0.0
      %611 = vmatprep.subr.mxu0 0.0
      %612 = vmatpush1.msra.mxu0 0.0
      %613 = vmatprep.subr.mxu0 0.0
      %614 = vmatpush1.msra.mxu0 0.0
      %615 = vmatprep.subr.mxu0 0.0
      %616 = vmatpush1.msra.mxu0 0.0
      %617 = vmatprep.subr.mxu0 0.0
      %618 = vmatpush1.msra.mxu0 0.0
      %619 = vmatprep.subr.mxu0 0.0
      %620 = vmatpush1.msra.mxu0 0.0
      %621 = vmatprep.subr.mxu0 0.0
      %622 = vmatpush1.msra.mxu0 0.0
      %623 = vmatprep.subr.mxu0 0.0
      %624 = vmatpush1.msra.mxu0 0.0
      %625 = vmatprep.subr.mxu0 0.0
      %626 = vmatpush1.msra.mxu0 0.0
      %627 = vmatprep.subr.mxu0 0.0
      %628 = vmatpush1.msra.mxu0 0.0
      %629 = vmatprep.subr.mxu0 0.0
      %630 = vmatpush1.msra.mxu0 %v597
      %631 = vmatprep.subr.mxu0 0.0
      %632 = vmatpush2.msra.mxu0 0.0
      %633 = vmatprep.subr.mxu0 0.0
      %634 = vmatpush2.msra.mxu0 0.0
      %635 = vmatprep.subr.mxu0 0.0
      %636 = vmatpush2.msra.mxu0 0.0
      %637 = vmatprep.subr.mxu0 0.0
      %638 = vmatpush2.msra.mxu0 0.0
      %639 = vmatprep.subr.mxu0 0.0
      %640 = vmatpush2.msra.mxu0 0.0
      %641 = vmatprep.subr.mxu0 0.0
      %642 = vmatpush2.msra.mxu0 0.0
      %643 = vmatprep.subr.mxu0 0.0
      %644 = vmatpush2.msra.mxu0 0.0
      %645 = vmatprep.subr.mxu0 0.0
      %646 = vmatpush2.msra.mxu0 0.0
      %647 = vmatprep.subr.mxu0 0.0
      %648 = vmatpush2.msra.mxu0 0.0
      %649 = vmatprep.subr.mxu0 0.0
      %650 = vmatpush2.msra.mxu0 0.0
      %651 = vmatprep.subr.mxu0 0.0
      %652 = vmatpush2.msra.mxu0 0.0
      %653 = vmatprep.subr.mxu0 0.0
      %654 = vmatpush2.msra.mxu0 0.0
      %655 = vmatprep.subr.mxu0 0.0
      %656 = vmatpush2.msra.mxu0 0.0
      %657 = vmatprep.subr.mxu0 0.0
      %658 = vmatpush2.msra.mxu0 0.0
      %659 = vmatprep.subr.mxu0 0.0
      %660 = vmatpush2.msra.mxu0 0.0
      %661 = vmatprep.subr.mxu0 0.0
      %662 = vmatpush2.msra.mxu0 0.0
      %663 = vmatprep.mubr.f32.mxu0 0.0
      %664 = vmatmul.mubr.f32.gmra.mxu0 %v500
      %v665 = vpop.f32.mrf.mxu0
      %v666 = vadd.f32 %v496, %v665
      %v667 = vpop.f32.mrf.mxu0
      %668 = vmatprep.mubr.f32.mxu0 0.0
      %669 = vmatmul.mubr.f32.gmra.mxu0 %v503
      %v670 = vpop.f32.mrf.mxu0
      %v671 = vadd.f32 %v496, %v670
      %v672 = vpop.f32.mrf.mxu0
      %673 = vmatprep.mubr.f32.mxu0 0.0
      %674 = vmatmul.mubr.f32.gmra.mxu0 %v506
      %v675 = vpop.f32.mrf.mxu0
      %v676 = vadd.f32 %v496, %v675
      %v677 = vpop.f32.mrf.mxu0
      %678 = vmatprep.mubr.f32.mxu0 0.0
      %679 = vmatmul.mubr.f32.gmra.mxu0 %v509
      %v680 = vpop.f32.mrf.mxu0
      %v681 = vadd.f32 %v496, %v680
      %v682 = vpop.f32.mrf.mxu0
      %683 = vmatprep.mubr.f32.mxu0 0.0
      %684 = vmatmul.mubr.f32.gmra.mxu0 %v512
      %v685 = vpop.f32.mrf.mxu0
      %v686 = vadd.f32 %v496, %v685
      %v687 = vpop.f32.mrf.mxu0
      %688 = vmatprep.mubr.f32.mxu0 0.0
      %689 = vmatmul.mubr.f32.gmra.mxu0 %v515
      %v690 = vpop.f32.mrf.mxu0
      %v691 = vadd.f32 %v496, %v690
      %v692 = vpop.f32.mrf.mxu0
      %693 = vmatprep.mubr.f32.mxu0 0.0
      %694 = vmatmul.mubr.f32.gmra.mxu0 %v518
      %v695 = vpop.f32.mrf.mxu0
      %v696 = vadd.f32 %v496, %v695
      %v697 = vpop.f32.mrf.mxu0
      %698 = vmatprep.mubr.f32.mxu0 0.0
      %699 = vmatmul.mubr.f32.gmra.mxu0 %v521
      %v700 = vpop.f32.mrf.mxu0
      %v701 = vadd.f32 %v496, %v700
      %v702 = vpop.f32.mrf.mxu0
      %703 = vmatprep.mubr.f32.mxu0 0.0
      %704 = vmatmul.mubr.f32.gmra.mxu0 %v524
      %v705 = vpop.f32.mrf.mxu0
      %v706 = vadd.f32 %v496, %v705
      %v707 = vpop.f32.mrf.mxu0
      %708 = vmatprep.mubr.f32.mxu0 0.0
      %709 = vmatmul.mubr.f32.gmra.mxu0 %v527
      %v710 = vpop.f32.mrf.mxu0
      %v711 = vadd.f32 %v496, %v710
      %v712 = vpop.f32.mrf.mxu0
      %713 = vmatprep.mubr.f32.mxu0 0.0
      %714 = vmatmul.mubr.f32.gmra.mxu0 %v530
      %v715 = vpop.f32.mrf.mxu0
      %v716 = vadd.f32 %v496, %v715
      %v717 = vpop.f32.mrf.mxu0
      %718 = vmatprep.mubr.f32.mxu0 0.0
      %719 = vmatmul.mubr.f32.gmra.mxu0 %v533
      %v720 = vpop.f32.mrf.mxu0
      %v721 = vadd.f32 %v496, %v720
      %v722 = vpop.f32.mrf.mxu0
      %723 = vmatprep.mubr.f32.mxu0 0.0
      %724 = vmatmul.mubr.f32.gmra.mxu0 %v536
      %v725 = vpop.f32.mrf.mxu0
      %v726 = vadd.f32 %v496, %v725
      %v727 = vpop.f32.mrf.mxu0
      %728 = vmatprep.mubr.f32.mxu0 0.0
      %729 = vmatmul.mubr.f32.gmra.mxu0 %v539
      %v730 = vpop.f32.mrf.mxu0
      %v731 = vadd.f32 %v496, %v730
      %v732 = vpop.f32.mrf.mxu0
      %733 = vmatprep.mubr.f32.mxu0 0.0
      %734 = vmatmul.mubr.f32.gmra.mxu0 %v542
      %v735 = vpop.f32.mrf.mxu0
      %v736 = vadd.f32 %v496, %v735
      %v737 = vpop.f32.mrf.mxu0
      %738 = vmatprep.mubr.f32.mxu0 0.0
      %739 = vmatmul.mubr.f32.gmra.mxu0 %v545
      %v740 = vpop.f32.mrf.mxu0
      %v741 = vadd.f32 %v496, %v740
      %v742 = vpop.f32.mrf.mxu0
      %743 = vmatprep.mubr.f32.mxu0 0.0
      %744 = vmatmul.mubr.f32.gmra.mxu0 %v548
      %v745 = vpop.f32.mrf.mxu0
      %v746 = vadd.f32 %v496, %v745
      %v747 = vpop.f32.mrf.mxu0
      %748 = vmatprep.mubr.f32.mxu0 0.0
      %749 = vmatmul.mubr.f32.gmra.mxu0 %v551
      %v750 = vpop.f32.mrf.mxu0
      %v751 = vadd.f32 %v496, %v750
      %v752 = vpop.f32.mrf.mxu0
      %753 = vmatprep.mubr.f32.mxu0 0.0
      %754 = vmatmul.mubr.f32.gmra.mxu0 %v554
      %v755 = vpop.f32.mrf.mxu0
      %v756 = vadd.f32 %v496, %v755
      %v757 = vpop.f32.mrf.mxu0
      %758 = vmatprep.mubr.f32.mxu0 0.0
      %759 = vmatmul.mubr.f32.gmra.mxu0 %v557
      %v760 = vpop.f32.mrf.mxu0
      %v761 = vadd.f32 %v496, %v760
      %v762 = vpop.f32.mrf.mxu0
      %763 = vmatprep.mubr.f32.mxu0 0.0
      %764 = vmatmul.mubr.f32.gmra.mxu0 %v560
      %v765 = vpop.f32.mrf.mxu0
      %v766 = vadd.f32 %v496, %v765
      %v767 = vpop.f32.mrf.mxu0
      %768 = vmatprep.mubr.f32.mxu0 0.0
      %769 = vmatmul.mubr.f32.gmra.mxu0 %v563
      %v770 = vpop.f32.mrf.mxu0
      %v771 = vadd.f32 %v496, %v770
      %v772 = vpop.f32.mrf.mxu0
      %773 = vmatprep.mubr.f32.mxu0 0.0
      %774 = vmatmul.mubr.f32.gmra.mxu0 %v566
      %v775 = vpop.f32.mrf.mxu0
      %v776 = vadd.f32 %v496, %v775
      %v777 = vpop.f32.mrf.mxu0
      %778 = vmatprep.mubr.f32.mxu0 0.0
      %779 = vmatmul.mubr.f32.gmra.mxu0 %v569
      %v780 = vpop.f32.mrf.mxu0
      %v781 = vadd.f32 %v496, %v780
      %v782 = vpop.f32.mrf.mxu0
      %783 = vmatprep.mubr.f32.mxu0 0.0
      %784 = vmatmul.mubr.f32.gmra.mxu0 %v572
      %v785 = vpop.f32.mrf.mxu0
      %v786 = vadd.f32 %v496, %v785
      %v787 = vpop.f32.mrf.mxu0
      %788 = vmatprep.mubr.f32.mxu0 0.0
      %789 = vmatmul.mubr.f32.gmra.mxu0 %v575
      %v790 = vpop.f32.mrf.mxu0
      %v791 = vadd.f32 %v496, %v790
      %v792 = vpop.f32.mrf.mxu0
      %793 = vmatprep.mubr.f32.mxu0 0.0
      %794 = vmatmul.mubr.f32.gmra.mxu0 %v578
      %v795 = vpop.f32.mrf.mxu0
      %v796 = vadd.f32 %v496, %v795
      %v797 = vpop.f32.mrf.mxu0
      %798 = vmatprep.mubr.f32.mxu0 0.0
      %799 = vmatmul.mubr.f32.gmra.mxu0 %v581
      %v800 = vpop.f32.mrf.mxu0
      %v801 = vadd.f32 %v496, %v800
      %v802 = vpop.f32.mrf.mxu0
      %803 = vmatprep.mubr.f32.mxu0 0.0
      %804 = vmatmul.mubr.f32.gmra.mxu0 %v584
      %v805 = vpop.f32.mrf.mxu0
      %v806 = vadd.f32 %v496, %v805
      %v807 = vpop.f32.mrf.mxu0
      %808 = vmatprep.mubr.f32.mxu0 0.0
      %809 = vmatmul.mubr.f32.gmra.mxu0 %v587
      %v810 = vpop.f32.mrf.mxu0
      %v811 = vadd.f32 %v496, %v810
      %v812 = vpop.f32.mrf.mxu0
      %813 = vmatprep.mubr.f32.mxu0 0.0
      %814 = vmatmul.mubr.f32.gmra.mxu0 %v590
      %v815 = vpop.f32.mrf.mxu0
      %v816 = vadd.f32 %v496, %v815
      %v817 = vpop.f32.mrf.mxu0
      %818 = vmatprep.mubr.f32.mxu0 0.0
      %819 = vmatmul.mubr.f32.gmra.mxu0 %v593
      %v820 = vpop.f32.mrf.mxu0
      %v821 = vadd.f32 %v496, %v820
      %v822 = vpop.f32.mrf.mxu0
      %823 = vdwg.mxu0
      %v824 = vmax.f32 %v666, 0.0
      %v825 = vmax.f32 %v671, 0.0
      %v826 = vmax.f32 %v676, 0.0
      %v827 = vmax.f32 %v681, 0.0
      %v828 = vmax.f32 %v686, 0.0
      %v829 = vmax.f32 %v691, 0.0
      %v830 = vmax.f32 %v696, 0.0
      %v831 = vmax.f32 %v701, 0.0
      %v832 = vmax.f32 %v706, 0.0
      %v833 = vmax.f32 %v711, 0.0
      %v834 = vmax.f32 %v716, 0.0
      %v835 = vmax.f32 %v721, 0.0
      %v836 = vmax.f32 %v726, 0.0
      %v837 = vmax.f32 %v731, 0.0
      %v838 = vmax.f32 %v736, 0.0
      %v839 = vmax.f32 %v741, 0.0
      %v840 = vmax.f32 %v746, 0.0
      %v841 = vmax.f32 %v751, 0.0
      %v842 = vmax.f32 %v756, 0.0
      %v843 = vmax.f32 %v761, 0.0
      %v844 = vmax.f32 %v766, 0.0
      %v845 = vmax.f32 %v771, 0.0
      %v846 = vmax.f32 %v776, 0.0
      %v847 = vmax.f32 %v781, 0.0
      %v848 = vmax.f32 %v786, 0.0
      %v849 = vmax.f32 %v791, 0.0
      %v850 = vmax.f32 %v796, 0.0
      %v851 = vmax.f32 %v801, 0.0
      %v852 = vmax.f32 %v806, 0.0
      %v853 = vmax.f32 %v811, 0.0
      %v854 = vmax.f32 %v816, 0.0
      %v855 = vmax.f32 %v821, 0.0
      %v856 = vld [vmem:[%s3] sm:$0xff]
      %v857 = vld [vmem:[%s3 + $0x8] sm:$0xff]
      %v858 = vld [vmem:[%s3 + $0x10] sm:$0xff]
      %v859 = vld [vmem:[%s3 + $0x18] sm:$0xff]
      %v860 = vld [vmem:[%s4] sm:$0x1]
      %v862 = vlaneseq
      %v863 = vshrl.u32 %v862, 7
      %v864 = vsub.s32 0, %v863
      %v865 = vrot.slane %v860, %v864
      %vm867 = vcmask 261120
      %v869 = vsel %vm867, %v824, 0
      %v872 = vsel %vm867, %v825, 0
      %v875 = vsel %vm867, %v826, 0
      %v878 = vsel %vm867, %v827, 0
      %v881 = vsel %vm867, %v828, 0
      %v884 = vsel %vm867, %v829, 0
      %v887 = vsel %vm867, %v830, 0
      %v890 = vsel %vm867, %v831, 0
      %v893 = vsel %vm867, %v832, 0
      %v896 = vsel %vm867, %v833, 0
      %v899 = vsel %vm867, %v834, 0
      %v902 = vsel %vm867, %v835, 0
      %v905 = vsel %vm867, %v836, 0
      %v908 = vsel %vm867, %v837, 0
      %v911 = vsel %vm867, %v838, 0
      %v914 = vsel %vm867, %v839, 0
      %v917 = vsel %vm867, %v840, 0
      %v920 = vsel %vm867, %v841, 0
      %v923 = vsel %vm867, %v842, 0
      %v926 = vsel %vm867, %v843, 0
      %v929 = vsel %vm867, %v844, 0
      %v932 = vsel %vm867, %v845, 0
      %v935 = vsel %vm867, %v846, 0
      %v938 = vsel %vm867, %v847, 0
      %v941 = vsel %vm867, %v848, 0
      %v944 = vsel %vm867, %v849, 0
      %v947 = vsel %vm867, %v850, 0
      %v950 = vsel %vm867, %v851, 0
      %v953 = vsel %vm867, %v852, 0
      %v956 = vsel %vm867, %v853, 0
      %v959 = vsel %vm867, %v854, 0
      %v962 = vsel %vm867, %v855, 0
      %964 = vmatprep.subr.mxu0 0.0
      %965 = vmatpush1.msra.mxu0 0.0
      %966 = vmatprep.subr.mxu0 0.0
      %967 = vmatpush1.msra.mxu0 0.0
      %968 = vmatprep.subr.mxu0 0.0
      %969 = vmatpush1.msra.mxu0 0.0
      %970 = vmatprep.subr.mxu0 0.0
      %971 = vmatpush1.msra.mxu0 0.0
      %972 = vmatprep.subr.mxu0 0.0
      %973 = vmatpush1.msra.mxu0 0.0
      %974 = vmatprep.subr.mxu0 0.0
      %975 = vmatpush1.msra.mxu0 0.0
      %976 = vmatprep.subr.mxu0 0.0
      %977 = vmatpush1.msra.mxu0 0.0
      %978 = vmatprep.subr.mxu0 0.0
      %979 = vmatpush1.msra.mxu0 0.0
      %980 = vmatprep.subr.mxu0 0.0
      %981 = vmatpush1.msra.mxu0 0.0
      %982 = vmatprep.subr.mxu0 0.0
      %983 = vmatpush1.msra.mxu0 0.0
      %984 = vmatprep.subr.mxu0 0.0
      %985 = vmatpush1.msra.mxu0 0.0
      %986 = vmatprep.subr.mxu0 0.0
      %987 = vmatpush1.msra.mxu0 0.0
      %988 = vmatprep.subr.mxu0 0.0
      %989 = vmatpush1.msra.mxu0 %v859
      %990 = vmatprep.subr.mxu0 0.0
      %991 = vmatpush1.msra.mxu0 %v858
      %992 = vmatprep.subr.mxu0 0.0
      %993 = vmatpush1.msra.mxu0 %v857
      %994 = vmatprep.subr.mxu0 0.0
      %995 = vmatpush1.msra.mxu0 %v856
      %996 = vmatprep.subr.mxu0 0.0
      %997 = vmatpush2.msra.mxu0 0.0
      %998 = vmatprep.subr.mxu0 0.0
      %999 = vmatpush2.msra.mxu0 0.0
      %1000 = vmatprep.subr.mxu0 0.0
      %1001 = vmatpush2.msra.mxu0 0.0
      %1002 = vmatprep.subr.mxu0 0.0
      %1003 = vmatpush2.msra.mxu0 0.0
      %1004 = vmatprep.subr.mxu0 0.0
      %1005 = vmatpush2.msra.mxu0 0.0
      %1006 = vmatprep.subr.mxu0 0.0
      %1007 = vmatpush2.msra.mxu0 0.0
      %1008 = vmatprep.subr.mxu0 0.0
      %1009 = vmatpush2.msra.mxu0 0.0
      %1010 = vmatprep.subr.mxu0 0.0
      %1011 = vmatpush2.msra.mxu0 0.0
      %1012 = vmatprep.subr.mxu0 0.0
      %1013 = vmatpush2.msra.mxu0 0.0
      %1014 = vmatprep.subr.mxu0 0.0
      %1015 = vmatpush2.msra.mxu0 0.0
      %1016 = vmatprep.subr.mxu0 0.0
      %1017 = vmatpush2.msra.mxu0 0.0
      %1018 = vmatprep.subr.mxu0 0.0
      %1019 = vmatpush2.msra.mxu0 0.0
      %1020 = vmatprep.subr.mxu0 0.0
      %1021 = vmatpush2.msra.mxu0 0.0
      %1022 = vmatprep.subr.mxu0 0.0
      %1023 = vmatpush2.msra.mxu0 0.0
      %1024 = vmatprep.subr.mxu0 0.0
      %1025 = vmatpush2.msra.mxu0 0.0
      %1026 = vmatprep.subr.mxu0 0.0
      %1027 = vmatpush2.msra.mxu0 0.0
      %1028 = vmatprep.mubr.f32.mxu0 0.0
      %1029 = vmatmul.mubr.f32.gmra.mxu0 %v869
      %v1030 = vpop.f32.mrf.mxu0
      %v1031 = vadd.f32 %v865, %v1030
      %v1032 = vpop.f32.mrf.mxu0
      %1033 = vmatprep.mubr.f32.mxu0 0.0
      %1034 = vmatmul.mubr.f32.gmra.mxu0 %v872
      %v1035 = vpop.f32.mrf.mxu0
      %v1036 = vadd.f32 %v865, %v1035
      %v1037 = vpop.f32.mrf.mxu0
      %1038 = vmatprep.mubr.f32.mxu0 0.0
      %1039 = vmatmul.mubr.f32.gmra.mxu0 %v875
      %v1040 = vpop.f32.mrf.mxu0
      %v1041 = vadd.f32 %v865, %v1040
      %v1042 = vpop.f32.mrf.mxu0
      %1043 = vmatprep.mubr.f32.mxu0 0.0
      %1044 = vmatmul.mubr.f32.gmra.mxu0 %v878
      %v1045 = vpop.f32.mrf.mxu0
      %v1046 = vadd.f32 %v865, %v1045
      %v1047 = vpop.f32.mrf.mxu0
      %1048 = vmatprep.mubr.f32.mxu0 0.0
      %1049 = vmatmul.mubr.f32.gmra.mxu0 %v881
      %v1050 = vpop.f32.mrf.mxu0
      %v1051 = vadd.f32 %v865, %v1050
      %v1052 = vpop.f32.mrf.mxu0
      %1053 = vmatprep.mubr.f32.mxu0 0.0
      %1054 = vmatmul.mubr.f32.gmra.mxu0 %v884
      %v1055 = vpop.f32.mrf.mxu0
      %v1056 = vadd.f32 %v865, %v1055
      %v1057 = vpop.f32.mrf.mxu0
      %1058 = vmatprep.mubr.f32.mxu0 0.0
      %1059 = vmatmul.mubr.f32.gmra.mxu0 %v887
      %v1060 = vpop.f32.mrf.mxu0
      %v1061 = vadd.f32 %v865, %v1060
      %v1062 = vpop.f32.mrf.mxu0
      %1063 = vmatprep.mubr.f32.mxu0 0.0
      %1064 = vmatmul.mubr.f32.gmra.mxu0 %v890
      %v1065 = vpop.f32.mrf.mxu0
      %v1066 = vadd.f32 %v865, %v1065
      %v1067 = vpop.f32.mrf.mxu0
      %1068 = vmatprep.mubr.f32.mxu0 0.0
      %1069 = vmatmul.mubr.f32.gmra.mxu0 %v893
      %v1070 = vpop.f32.mrf.mxu0
      %v1071 = vadd.f32 %v865, %v1070
      %v1072 = vpop.f32.mrf.mxu0
      %1073 = vmatprep.mubr.f32.mxu0 0.0
      %1074 = vmatmul.mubr.f32.gmra.mxu0 %v896
      %v1075 = vpop.f32.mrf.mxu0
      %v1076 = vadd.f32 %v865, %v1075
      %v1077 = vpop.f32.mrf.mxu0
      %1078 = vmatprep.mubr.f32.mxu0 0.0
      %1079 = vmatmul.mubr.f32.gmra.mxu0 %v899
      %v1080 = vpop.f32.mrf.mxu0
      %v1081 = vadd.f32 %v865, %v1080
      %v1082 = vpop.f32.mrf.mxu0
      %1083 = vmatprep.mubr.f32.mxu0 0.0
      %1084 = vmatmul.mubr.f32.gmra.mxu0 %v902
      %v1085 = vpop.f32.mrf.mxu0
      %v1086 = vadd.f32 %v865, %v1085
      %v1087 = vpop.f32.mrf.mxu0
      %1088 = vmatprep.mubr.f32.mxu0 0.0
      %1089 = vmatmul.mubr.f32.gmra.mxu0 %v905
      %v1090 = vpop.f32.mrf.mxu0
      %v1091 = vadd.f32 %v865, %v1090
      %v1092 = vpop.f32.mrf.mxu0
      %1093 = vmatprep.mubr.f32.mxu0 0.0
      %1094 = vmatmul.mubr.f32.gmra.mxu0 %v908
      %v1095 = vpop.f32.mrf.mxu0
      %v1096 = vadd.f32 %v865, %v1095
      %v1097 = vpop.f32.mrf.mxu0
      %1098 = vmatprep.mubr.f32.mxu0 0.0
      %1099 = vmatmul.mubr.f32.gmra.mxu0 %v911
      %v1100 = vpop.f32.mrf.mxu0
      %v1101 = vadd.f32 %v865, %v1100
      %v1102 = vpop.f32.mrf.mxu0
      %1103 = vmatprep.mubr.f32.mxu0 0.0
      %1104 = vmatmul.mubr.f32.gmra.mxu0 %v914
      %v1105 = vpop.f32.mrf.mxu0
      %v1106 = vadd.f32 %v865, %v1105
      %v1107 = vpop.f32.mrf.mxu0
      %1108 = vmatprep.mubr.f32.mxu0 0.0
      %1109 = vmatmul.mubr.f32.gmra.mxu0 %v917
      %v1110 = vpop.f32.mrf.mxu0
      %v1111 = vadd.f32 %v865, %v1110
      %v1112 = vpop.f32.mrf.mxu0
      %1113 = vmatprep.mubr.f32.mxu0 0.0
      %1114 = vmatmul.mubr.f32.gmra.mxu0 %v920
      %v1115 = vpop.f32.mrf.mxu0
      %v1116 = vadd.f32 %v865, %v1115
      %v1117 = vpop.f32.mrf.mxu0
      %1118 = vmatprep.mubr.f32.mxu0 0.0
      %1119 = vmatmul.mubr.f32.gmra.mxu0 %v923
      %v1120 = vpop.f32.mrf.mxu0
      %v1121 = vadd.f32 %v865, %v1120
      %v1122 = vpop.f32.mrf.mxu0
      %1123 = vmatprep.mubr.f32.mxu0 0.0
      %1124 = vmatmul.mubr.f32.gmra.mxu0 %v926
      %v1125 = vpop.f32.mrf.mxu0
      %v1126 = vadd.f32 %v865, %v1125
      %v1127 = vpop.f32.mrf.mxu0
      %1128 = vmatprep.mubr.f32.mxu0 0.0
      %1129 = vmatmul.mubr.f32.gmra.mxu0 %v929
      %v1130 = vpop.f32.mrf.mxu0
      %v1131 = vadd.f32 %v865, %v1130
      %v1132 = vpop.f32.mrf.mxu0
      %1133 = vmatprep.mubr.f32.mxu0 0.0
      %1134 = vmatmul.mubr.f32.gmra.mxu0 %v932
      %v1135 = vpop.f32.mrf.mxu0
      %v1136 = vadd.f32 %v865, %v1135
      %v1137 = vpop.f32.mrf.mxu0
      %1138 = vmatprep.mubr.f32.mxu0 0.0
      %1139 = vmatmul.mubr.f32.gmra.mxu0 %v935
      %v1140 = vpop.f32.mrf.mxu0
      %v1141 = vadd.f32 %v865, %v1140
      %v1142 = vpop.f32.mrf.mxu0
      %1143 = vmatprep.mubr.f32.mxu0 0.0
      %1144 = vmatmul.mubr.f32.gmra.mxu0 %v938
      %v1145 = vpop.f32.mrf.mxu0
      %v1146 = vadd.f32 %v865, %v1145
      %v1147 = vpop.f32.mrf.mxu0
      %1148 = vmatprep.mubr.f32.mxu0 0.0
      %1149 = vmatmul.mubr.f32.gmra.mxu0 %v941
      %v1150 = vpop.f32.mrf.mxu0
      %v1151 = vadd.f32 %v865, %v1150
      %v1152 = vpop.f32.mrf.mxu0
      %1153 = vmatprep.mubr.f32.mxu0 0.0
      %1154 = vmatmul.mubr.f32.gmra.mxu0 %v944
      %v1155 = vpop.f32.mrf.mxu0
      %v1156 = vadd.f32 %v865, %v1155
      %v1157 = vpop.f32.mrf.mxu0
      %1158 = vmatprep.mubr.f32.mxu0 0.0
      %1159 = vmatmul.mubr.f32.gmra.mxu0 %v947
      %v1160 = vpop.f32.mrf.mxu0
      %v1161 = vadd.f32 %v865, %v1160
      %v1162 = vpop.f32.mrf.mxu0
      %1163 = vmatprep.mubr.f32.mxu0 0.0
      %1164 = vmatmul.mubr.f32.gmra.mxu0 %v950
      %v1165 = vpop.f32.mrf.mxu0
      %v1166 = vadd.f32 %v865, %v1165
      %v1167 = vpop.f32.mrf.mxu0
      %1168 = vmatprep.mubr.f32.mxu0 0.0
      %1169 = vmatmul.mubr.f32.gmra.mxu0 %v953
      %v1170 = vpop.f32.mrf.mxu0
      %v1171 = vadd.f32 %v865, %v1170
      %v1172 = vpop.f32.mrf.mxu0
      %1173 = vmatprep.mubr.f32.mxu0 0.0
      %1174 = vmatmul.mubr.f32.gmra.mxu0 %v956
      %v1175 = vpop.f32.mrf.mxu0
      %v1176 = vadd.f32 %v865, %v1175
      %v1177 = vpop.f32.mrf.mxu0
      %1178 = vmatprep.mubr.f32.mxu0 0.0
      %1179 = vmatmul.mubr.f32.gmra.mxu0 %v959
      %v1180 = vpop.f32.mrf.mxu0
      %v1181 = vadd.f32 %v865, %v1180
      %v1182 = vpop.f32.mrf.mxu0
      %1183 = vmatprep.mubr.f32.mxu0 0.0
      %1184 = vmatmul.mubr.f32.gmra.mxu0 %v962
      %v1185 = vpop.f32.mrf.mxu0
      %v1186 = vadd.f32 %v865, %v1185
      %v1187 = vpop.f32.mrf.mxu0
      %1188 = vdwg.mxu0
      %v1189 = vmax.f32 %v1031, 0.0
      %v1190 = vmax.f32 %v1036, 0.0
      %v1191 = vmax.f32 %v1041, 0.0
      %v1192 = vmax.f32 %v1046, 0.0
      %v1193 = vmax.f32 %v1051, 0.0
      %v1194 = vmax.f32 %v1056, 0.0
      %v1195 = vmax.f32 %v1061, 0.0
      %v1196 = vmax.f32 %v1066, 0.0
      %v1197 = vmax.f32 %v1071, 0.0
      %v1198 = vmax.f32 %v1076, 0.0
      %v1199 = vmax.f32 %v1081, 0.0
      %v1200 = vmax.f32 %v1086, 0.0
      %v1201 = vmax.f32 %v1091, 0.0
      %v1202 = vmax.f32 %v1096, 0.0
      %v1203 = vmax.f32 %v1101, 0.0
      %v1204 = vmax.f32 %v1106, 0.0
      %v1205 = vmax.f32 %v1111, 0.0
      %v1206 = vmax.f32 %v1116, 0.0
      %v1207 = vmax.f32 %v1121, 0.0
      %v1208 = vmax.f32 %v1126, 0.0
      %v1209 = vmax.f32 %v1131, 0.0
      %v1210 = vmax.f32 %v1136, 0.0
      %v1211 = vmax.f32 %v1141, 0.0
      %v1212 = vmax.f32 %v1146, 0.0
      %v1213 = vmax.f32 %v1151, 0.0
      %v1214 = vmax.f32 %v1156, 0.0
      %v1215 = vmax.f32 %v1161, 0.0
      %v1216 = vmax.f32 %v1166, 0.0
      %v1217 = vmax.f32 %v1171, 0.0
      %v1218 = vmax.f32 %v1176, 0.0
      %v1219 = vmax.f32 %v1181, 0.0
      %v1220 = vmax.f32 %v1186, 0.0
      %v1221 = vld [vmem:[%s5] sm:$0xff]
      %v1222 = vld [vmem:[%s5 + $0x8] sm:$0xff]
      %v1223 = vld [vmem:[%s5 + $0x10] sm:$0xff]
      %v1224 = vld [vmem:[%s5 + $0x18] sm:$0xff]
      %v1225 = vld [vmem:[%s6] sm:$0x1]
      %v1227 = vlaneseq
      %v1228 = vshrl.u32 %v1227, 7
      %v1229 = vsub.s32 0, %v1228
      %v1230 = vrot.slane %v1225, %v1229
      %v1233 = vsel %vm867, %v1189, 0
      %v1236 = vsel %vm867, %v1190, 0
      %v1239 = vsel %vm867, %v1191, 0
      %v1242 = vsel %vm867, %v1192, 0
      %v1245 = vsel %vm867, %v1193, 0
      %v1248 = vsel %vm867, %v1194, 0
      %v1251 = vsel %vm867, %v1195, 0
      %v1254 = vsel %vm867, %v1196, 0
      %v1257 = vsel %vm867, %v1197, 0
      %v1260 = vsel %vm867, %v1198, 0
      %v1263 = vsel %vm867, %v1199, 0
      %v1266 = vsel %vm867, %v1200, 0
      %v1269 = vsel %vm867, %v1201, 0
      %v1272 = vsel %vm867, %v1202, 0
      %v1275 = vsel %vm867, %v1203, 0
      %v1278 = vsel %vm867, %v1204, 0
      %v1281 = vsel %vm867, %v1205, 0
      %v1284 = vsel %vm867, %v1206, 0
      %v1287 = vsel %vm867, %v1207, 0
      %v1290 = vsel %vm867, %v1208, 0
      %v1293 = vsel %vm867, %v1209, 0
      %v1296 = vsel %vm867, %v1210, 0
      %v1299 = vsel %vm867, %v1211, 0
      %v1302 = vsel %vm867, %v1212, 0
      %v1305 = vsel %vm867, %v1213, 0
      %v1308 = vsel %vm867, %v1214, 0
      %v1311 = vsel %vm867, %v1215, 0
      %v1314 = vsel %vm867, %v1216, 0
      %v1317 = vsel %vm867, %v1217, 0
      %v1320 = vsel %vm867, %v1218, 0
      %v1323 = vsel %vm867, %v1219, 0
      %v1326 = vsel %vm867, %v1220, 0
      %1328 = vmatprep.subr.mxu0 0.0
      %1329 = vmatpush1.msra.mxu0 0.0
      %1330 = vmatprep.subr.mxu0 0.0
      %1331 = vmatpush1.msra.mxu0 0.0
      %1332 = vmatprep.subr.mxu0 0.0
      %1333 = vmatpush1.msra.mxu0 0.0
      %1334 = vmatprep.subr.mxu0 0.0
      %1335 = vmatpush1.msra.mxu0 0.0
      %1336 = vmatprep.subr.mxu0 0.0
      %1337 = vmatpush1.msra.mxu0 0.0
      %1338 = vmatprep.subr.mxu0 0.0
      %1339 = vmatpush1.msra.mxu0 0.0
      %1340 = vmatprep.subr.mxu0 0.0
      %1341 = vmatpush1.msra.mxu0 0.0
      %1342 = vmatprep.subr.mxu0 0.0
      %1343 = vmatpush1.msra.mxu0 0.0
      %1344 = vmatprep.subr.mxu0 0.0
      %1345 = vmatpush1.msra.mxu0 0.0
      %1346 = vmatprep.subr.mxu0 0.0
      %1347 = vmatpush1.msra.mxu0 0.0
      %1348 = vmatprep.subr.mxu0 0.0
      %1349 = vmatpush1.msra.mxu0 0.0
      %1350 = vmatprep.subr.mxu0 0.0
      %1351 = vmatpush1.msra.mxu0 0.0
      %1352 = vmatprep.subr.mxu0 0.0
      %1353 = vmatpush1.msra.mxu0 %v1224
      %1354 = vmatprep.subr.mxu0 0.0
      %1355 = vmatpush1.msra.mxu0 %v1223
      %1356 = vmatprep.subr.mxu0 0.0
      %1357 = vmatpush1.msra.mxu0 %v1222
      %1358 = vmatprep.subr.mxu0 0.0
      %1359 = vmatpush1.msra.mxu0 %v1221
      %1360 = vmatprep.subr.mxu0 0.0
      %1361 = vmatpush2.msra.mxu0 0.0
      %1362 = vmatprep.subr.mxu0 0.0
      %1363 = vmatpush2.msra.mxu0 0.0
      %1364 = vmatprep.subr.mxu0 0.0
      %1365 = vmatpush2.msra.mxu0 0.0
      %1366 = vmatprep.subr.mxu0 0.0
      %1367 = vmatpush2.msra.mxu0 0.0
      %1368 = vmatprep.subr.mxu0 0.0
      %1369 = vmatpush2.msra.mxu0 0.0
      %1370 = vmatprep.subr.mxu0 0.0
      %1371 = vmatpush2.msra.mxu0 0.0
      %1372 = vmatprep.subr.mxu0 0.0
      %1373 = vmatpush2.msra.mxu0 0.0
      %1374 = vmatprep.subr.mxu0 0.0
      %1375 = vmatpush2.msra.mxu0 0.0
      %1376 = vmatprep.subr.mxu0 0.0
      %1377 = vmatpush2.msra.mxu0 0.0
      %1378 = vmatprep.subr.mxu0 0.0
      %1379 = vmatpush2.msra.mxu0 0.0
      %1380 = vmatprep.subr.mxu0 0.0
      %1381 = vmatpush2.msra.mxu0 0.0
      %1382 = vmatprep.subr.mxu0 0.0
      %1383 = vmatpush2.msra.mxu0 0.0
      %1384 = vmatprep.subr.mxu0 0.0
      %1385 = vmatpush2.msra.mxu0 0.0
      %1386 = vmatprep.subr.mxu0 0.0
      %1387 = vmatpush2.msra.mxu0 0.0
      %1388 = vmatprep.subr.mxu0 0.0
      %1389 = vmatpush2.msra.mxu0 0.0
      %1390 = vmatprep.subr.mxu0 0.0
      %1391 = vmatpush2.msra.mxu0 0.0
      %1392 = vmatprep.mubr.f32.mxu0 0.0
      %1393 = vmatmul.mubr.f32.gmra.mxu0 %v1233
      %v1394 = vpop.f32.mrf.mxu0
      %v1395 = vadd.f32 %v1230, %v1394
      %v1396 = vpop.f32.mrf.mxu0
      %1397 = vmatprep.mubr.f32.mxu0 0.0
      %1398 = vmatmul.mubr.f32.gmra.mxu0 %v1236
      %v1399 = vpop.f32.mrf.mxu0
      %v1400 = vadd.f32 %v1230, %v1399
      %v1401 = vpop.f32.mrf.mxu0
      %1402 = vmatprep.mubr.f32.mxu0 0.0
      %1403 = vmatmul.mubr.f32.gmra.mxu0 %v1239
      %v1404 = vpop.f32.mrf.mxu0
      %v1405 = vadd.f32 %v1230, %v1404
      %v1406 = vpop.f32.mrf.mxu0
      %1407 = vmatprep.mubr.f32.mxu0 0.0
      %1408 = vmatmul.mubr.f32.gmra.mxu0 %v1242
      %v1409 = vpop.f32.mrf.mxu0
      %v1410 = vadd.f32 %v1230, %v1409
      %v1411 = vpop.f32.mrf.mxu0
      %1412 = vmatprep.mubr.f32.mxu0 0.0
      %1413 = vmatmul.mubr.f32.gmra.mxu0 %v1245
      %v1414 = vpop.f32.mrf.mxu0
      %v1415 = vadd.f32 %v1230, %v1414
      %v1416 = vpop.f32.mrf.mxu0
      %1417 = vmatprep.mubr.f32.mxu0 0.0
      %1418 = vmatmul.mubr.f32.gmra.mxu0 %v1248
      %v1419 = vpop.f32.mrf.mxu0
      %v1420 = vadd.f32 %v1230, %v1419
      %v1421 = vpop.f32.mrf.mxu0
      %1422 = vmatprep.mubr.f32.mxu0 0.0
      %1423 = vmatmul.mubr.f32.gmra.mxu0 %v1251
      %v1424 = vpop.f32.mrf.mxu0
      %v1425 = vadd.f32 %v1230, %v1424
      %v1426 = vpop.f32.mrf.mxu0
      %1427 = vmatprep.mubr.f32.mxu0 0.0
      %1428 = vmatmul.mubr.f32.gmra.mxu0 %v1254
      %v1429 = vpop.f32.mrf.mxu0
      %v1430 = vadd.f32 %v1230, %v1429
      %v1431 = vpop.f32.mrf.mxu0
      %1432 = vmatprep.mubr.f32.mxu0 0.0
      %1433 = vmatmul.mubr.f32.gmra.mxu0 %v1257
      %v1434 = vpop.f32.mrf.mxu0
      %v1435 = vadd.f32 %v1230, %v1434
      %v1436 = vpop.f32.mrf.mxu0
      %1437 = vmatprep.mubr.f32.mxu0 0.0
      %1438 = vmatmul.mubr.f32.gmra.mxu0 %v1260
      %v1439 = vpop.f32.mrf.mxu0
      %v1440 = vadd.f32 %v1230, %v1439
      %v1441 = vpop.f32.mrf.mxu0
      %1442 = vmatprep.mubr.f32.mxu0 0.0
      %1443 = vmatmul.mubr.f32.gmra.mxu0 %v1263
      %v1444 = vpop.f32.mrf.mxu0
      %v1445 = vadd.f32 %v1230, %v1444
      %v1446 = vpop.f32.mrf.mxu0
      %1447 = vmatprep.mubr.f32.mxu0 0.0
      %1448 = vmatmul.mubr.f32.gmra.mxu0 %v1266
      %v1449 = vpop.f32.mrf.mxu0
      %v1450 = vadd.f32 %v1230, %v1449
      %v1451 = vpop.f32.mrf.mxu0
      %1452 = vmatprep.mubr.f32.mxu0 0.0
      %1453 = vmatmul.mubr.f32.gmra.mxu0 %v1269
      %v1454 = vpop.f32.mrf.mxu0
      %v1455 = vadd.f32 %v1230, %v1454
      %v1456 = vpop.f32.mrf.mxu0
      %1457 = vmatprep.mubr.f32.mxu0 0.0
      %1458 = vmatmul.mubr.f32.gmra.mxu0 %v1272
      %v1459 = vpop.f32.mrf.mxu0
      %v1460 = vadd.f32 %v1230, %v1459
      %v1461 = vpop.f32.mrf.mxu0
      %1462 = vmatprep.mubr.f32.mxu0 0.0
      %1463 = vmatmul.mubr.f32.gmra.mxu0 %v1275
      %v1464 = vpop.f32.mrf.mxu0
      %v1465 = vadd.f32 %v1230, %v1464
      %v1466 = vpop.f32.mrf.mxu0
      %1467 = vmatprep.mubr.f32.mxu0 0.0
      %1468 = vmatmul.mubr.f32.gmra.mxu0 %v1278
      %v1469 = vpop.f32.mrf.mxu0
      %v1470 = vadd.f32 %v1230, %v1469
      %v1471 = vpop.f32.mrf.mxu0
      %1472 = vmatprep.mubr.f32.mxu0 0.0
      %1473 = vmatmul.mubr.f32.gmra.mxu0 %v1281
      %v1474 = vpop.f32.mrf.mxu0
      %v1475 = vadd.f32 %v1230, %v1474
      %v1476 = vpop.f32.mrf.mxu0
      %1477 = vmatprep.mubr.f32.mxu0 0.0
      %1478 = vmatmul.mubr.f32.gmra.mxu0 %v1284
      %v1479 = vpop.f32.mrf.mxu0
      %v1480 = vadd.f32 %v1230, %v1479
      %v1481 = vpop.f32.mrf.mxu0
      %1482 = vmatprep.mubr.f32.mxu0 0.0
      %1483 = vmatmul.mubr.f32.gmra.mxu0 %v1287
      %v1484 = vpop.f32.mrf.mxu0
      %v1485 = vadd.f32 %v1230, %v1484
      %v1486 = vpop.f32.mrf.mxu0
      %1487 = vmatprep.mubr.f32.mxu0 0.0
      %1488 = vmatmul.mubr.f32.gmra.mxu0 %v1290
      %v1489 = vpop.f32.mrf.mxu0
      %v1490 = vadd.f32 %v1230, %v1489
      %v1491 = vpop.f32.mrf.mxu0
      %1492 = vmatprep.mubr.f32.mxu0 0.0
      %1493 = vmatmul.mubr.f32.gmra.mxu0 %v1293
      %v1494 = vpop.f32.mrf.mxu0
      %v1495 = vadd.f32 %v1230, %v1494
      %v1496 = vpop.f32.mrf.mxu0
      %1497 = vmatprep.mubr.f32.mxu0 0.0
      %1498 = vmatmul.mubr.f32.gmra.mxu0 %v1296
      %v1499 = vpop.f32.mrf.mxu0
      %v1500 = vadd.f32 %v1230, %v1499
      %v1501 = vpop.f32.mrf.mxu0
      %1502 = vmatprep.mubr.f32.mxu0 0.0
      %1503 = vmatmul.mubr.f32.gmra.mxu0 %v1299
      %v1504 = vpop.f32.mrf.mxu0
      %v1505 = vadd.f32 %v1230, %v1504
      %v1506 = vpop.f32.mrf.mxu0
      %1507 = vmatprep.mubr.f32.mxu0 0.0
      %1508 = vmatmul.mubr.f32.gmra.mxu0 %v1302
      %v1509 = vpop.f32.mrf.mxu0
      %v1510 = vadd.f32 %v1230, %v1509
      %v1511 = vpop.f32.mrf.mxu0
      %1512 = vmatprep.mubr.f32.mxu0 0.0
      %1513 = vmatmul.mubr.f32.gmra.mxu0 %v1305
      %v1514 = vpop.f32.mrf.mxu0
      %v1515 = vadd.f32 %v1230, %v1514
      %v1516 = vpop.f32.mrf.mxu0
      %1517 = vmatprep.mubr.f32.mxu0 0.0
      %1518 = vmatmul.mubr.f32.gmra.mxu0 %v1308
      %v1519 = vpop.f32.mrf.mxu0
      %v1520 = vadd.f32 %v1230, %v1519
      %v1521 = vpop.f32.mrf.mxu0
      %1522 = vmatprep.mubr.f32.mxu0 0.0
      %1523 = vmatmul.mubr.f32.gmra.mxu0 %v1311
      %v1524 = vpop.f32.mrf.mxu0
      %v1525 = vadd.f32 %v1230, %v1524
      %v1526 = vpop.f32.mrf.mxu0
      %1527 = vmatprep.mubr.f32.mxu0 0.0
      %1528 = vmatmul.mubr.f32.gmra.mxu0 %v1314
      %v1529 = vpop.f32.mrf.mxu0
      %v1530 = vadd.f32 %v1230, %v1529
      %v1531 = vpop.f32.mrf.mxu0
      %1532 = vmatprep.mubr.f32.mxu0 0.0
      %1533 = vmatmul.mubr.f32.gmra.mxu0 %v1317
      %v1534 = vpop.f32.mrf.mxu0
      %v1535 = vadd.f32 %v1230, %v1534
      %v1536 = vpop.f32.mrf.mxu0
      %1537 = vmatprep.mubr.f32.mxu0 0.0
      %1538 = vmatmul.mubr.f32.gmra.mxu0 %v1320
      %v1539 = vpop.f32.mrf.mxu0
      %v1540 = vadd.f32 %v1230, %v1539
      %v1541 = vpop.f32.mrf.mxu0
      %1542 = vmatprep.mubr.f32.mxu0 0.0
      %1543 = vmatmul.mubr.f32.gmra.mxu0 %v1323
      %v1544 = vpop.f32.mrf.mxu0
      %v1545 = vadd.f32 %v1230, %v1544
      %v1546 = vpop.f32.mrf.mxu0
      %1547 = vmatprep.mubr.f32.mxu0 0.0
      %1548 = vmatmul.mubr.f32.gmra.mxu0 %v1326
      %v1549 = vpop.f32.mrf.mxu0
      %v1550 = vadd.f32 %v1230, %v1549
      %v1551 = vpop.f32.mrf.mxu0
      %1552 = vdwg.mxu0
      %v1553 = vmax.f32 %v1395, 0.0
      %v1554 = vmax.f32 %v1400, 0.0
      %v1555 = vmax.f32 %v1405, 0.0
      %v1556 = vmax.f32 %v1410, 0.0
      %v1557 = vmax.f32 %v1415, 0.0
      %v1558 = vmax.f32 %v1420, 0.0
      %v1559 = vmax.f32 %v1425, 0.0
      %v1560 = vmax.f32 %v1430, 0.0
      %v1561 = vmax.f32 %v1435, 0.0
      %v1562 = vmax.f32 %v1440, 0.0
      %v1563 = vmax.f32 %v1445, 0.0
      %v1564 = vmax.f32 %v1450, 0.0
      %v1565 = vmax.f32 %v1455, 0.0
      %v1566 = vmax.f32 %v1460, 0.0
      %v1567 = vmax.f32 %v1465, 0.0
      %v1568 = vmax.f32 %v1470, 0.0
      %v1569 = vmax.f32 %v1475, 0.0
      %v1570 = vmax.f32 %v1480, 0.0
      %v1571 = vmax.f32 %v1485, 0.0
      %v1572 = vmax.f32 %v1490, 0.0
      %v1573 = vmax.f32 %v1495, 0.0
      %v1574 = vmax.f32 %v1500, 0.0
      %v1575 = vmax.f32 %v1505, 0.0
      %v1576 = vmax.f32 %v1510, 0.0
      %v1577 = vmax.f32 %v1515, 0.0
      %v1578 = vmax.f32 %v1520, 0.0
      %v1579 = vmax.f32 %v1525, 0.0
      %v1580 = vmax.f32 %v1530, 0.0
      %v1581 = vmax.f32 %v1535, 0.0
      %v1582 = vmax.f32 %v1540, 0.0
      %v1583 = vmax.f32 %v1545, 0.0
      %v1584 = vmax.f32 %v1550, 0.0
      %v1585 = vld [vmem:[%s7] sm:$0xff]
      %v1586 = vld [vmem:[%s7 + $0x8] sm:$0xff]
      %v1587 = vld [vmem:[%s7 + $0x10] sm:$0xff]
      %v1588 = vld [vmem:[%s7 + $0x18] sm:$0xff]
      %v1589 = vld [vmem:[%s8] sm:$0x1]
      %v1591 = vlaneseq
      %v1592 = vshrl.u32 %v1591, 7
      %v1593 = vsub.s32 0, %v1592
      %v1594 = vrot.slane %v1589, %v1593
      %v1597 = vsel %vm867, %v1553, 0
      %v1600 = vsel %vm867, %v1554, 0
      %v1603 = vsel %vm867, %v1555, 0
      %v1606 = vsel %vm867, %v1556, 0
      %v1609 = vsel %vm867, %v1557, 0
      %v1612 = vsel %vm867, %v1558, 0
      %v1615 = vsel %vm867, %v1559, 0
      %v1618 = vsel %vm867, %v1560, 0
      %v1621 = vsel %vm867, %v1561, 0
      %v1624 = vsel %vm867, %v1562, 0
      %v1627 = vsel %vm867, %v1563, 0
      %v1630 = vsel %vm867, %v1564, 0
      %v1633 = vsel %vm867, %v1565, 0
      %v1636 = vsel %vm867, %v1566, 0
      %v1639 = vsel %vm867, %v1567, 0
      %v1642 = vsel %vm867, %v1568, 0
      %v1645 = vsel %vm867, %v1569, 0
      %v1648 = vsel %vm867, %v1570, 0
      %v1651 = vsel %vm867, %v1571, 0
      %v1654 = vsel %vm867, %v1572, 0
      %v1657 = vsel %vm867, %v1573, 0
      %v1660 = vsel %vm867, %v1574, 0
      %v1663 = vsel %vm867, %v1575, 0
      %v1666 = vsel %vm867, %v1576, 0
      %v1669 = vsel %vm867, %v1577, 0
      %v1672 = vsel %vm867, %v1578, 0
      %v1675 = vsel %vm867, %v1579, 0
      %v1678 = vsel %vm867, %v1580, 0
      %v1681 = vsel %vm867, %v1581, 0
      %v1684 = vsel %vm867, %v1582, 0
      %v1687 = vsel %vm867, %v1583, 0
      %v1690 = vsel %vm867, %v1584, 0
      %1692 = vmatprep.subr.mxu0 0.0
      %1693 = vmatpush1.msra.mxu0 0.0
      %1694 = vmatprep.subr.mxu0 0.0
      %1695 = vmatpush1.msra.mxu0 0.0
      %1696 = vmatprep.subr.mxu0 0.0
      %1697 = vmatpush1.msra.mxu0 0.0
      %1698 = vmatprep.subr.mxu0 0.0
      %1699 = vmatpush1.msra.mxu0 0.0
      %1700 = vmatprep.subr.mxu0 0.0
      %1701 = vmatpush1.msra.mxu0 0.0
      %1702 = vmatprep.subr.mxu0 0.0
      %1703 = vmatpush1.msra.mxu0 0.0
      %1704 = vmatprep.subr.mxu0 0.0
      %1705 = vmatpush1.msra.mxu0 0.0
      %1706 = vmatprep.subr.mxu0 0.0
      %1707 = vmatpush1.msra.mxu0 0.0
      %1708 = vmatprep.subr.mxu0 0.0
      %1709 = vmatpush1.msra.mxu0 0.0
      %1710 = vmatprep.subr.mxu0 0.0
      %1711 = vmatpush1.msra.mxu0 0.0
      %1712 = vmatprep.subr.mxu0 0.0
      %1713 = vmatpush1.msra.mxu0 0.0
      %1714 = vmatprep.subr.mxu0 0.0
      %1715 = vmatpush1.msra.mxu0 0.0
      %1716 = vmatprep.subr.mxu0 0.0
      %1717 = vmatpush1.msra.mxu0 %v1588
      %1718 = vmatprep.subr.mxu0 0.0
      %1719 = vmatpush1.msra.mxu0 %v1587
      %1720 = vmatprep.subr.mxu0 0.0
      %1721 = vmatpush1.msra.mxu0 %v1586
      %1722 = vmatprep.subr.mxu0 0.0
      %1723 = vmatpush1.msra.mxu0 %v1585
      %1724 = vmatprep.subr.mxu0 0.0
      %1725 = vmatpush2.msra.mxu0 0.0
      %1726 = vmatprep.subr.mxu0 0.0
      %1727 = vmatpush2.msra.mxu0 0.0
      %1728 = vmatprep.subr.mxu0 0.0
      %1729 = vmatpush2.msra.mxu0 0.0
      %1730 = vmatprep.subr.mxu0 0.0
      %1731 = vmatpush2.msra.mxu0 0.0
      %1732 = vmatprep.subr.mxu0 0.0
      %1733 = vmatpush2.msra.mxu0 0.0
      %1734 = vmatprep.subr.mxu0 0.0
      %1735 = vmatpush2.msra.mxu0 0.0
      %1736 = vmatprep.subr.mxu0 0.0
      %1737 = vmatpush2.msra.mxu0 0.0
      %1738 = vmatprep.subr.mxu0 0.0
      %1739 = vmatpush2.msra.mxu0 0.0
      %1740 = vmatprep.subr.mxu0 0.0
      %1741 = vmatpush2.msra.mxu0 0.0
      %1742 = vmatprep.subr.mxu0 0.0
      %1743 = vmatpush2.msra.mxu0 0.0
      %1744 = vmatprep.subr.mxu0 0.0
      %1745 = vmatpush2.msra.mxu0 0.0
      %1746 = vmatprep.subr.mxu0 0.0
      %1747 = vmatpush2.msra.mxu0 0.0
      %1748 = vmatprep.subr.mxu0 0.0
      %1749 = vmatpush2.msra.mxu0 0.0
      %1750 = vmatprep.subr.mxu0 0.0
      %1751 = vmatpush2.msra.mxu0 0.0
      %1752 = vmatprep.subr.mxu0 0.0
      %1753 = vmatpush2.msra.mxu0 0.0
      %1754 = vmatprep.subr.mxu0 0.0
      %1755 = vmatpush2.msra.mxu0 0.0
      %1756 = vmatprep.mubr.f32.mxu0 0.0
      %1757 = vmatmul.mubr.f32.gmra.mxu0 %v1597
      %v1758 = vpop.f32.mrf.mxu0
      %v1759 = vadd.f32 %v1594, %v1758
      %v1760 = vpop.f32.mrf.mxu0
      %1761 = vmatprep.mubr.f32.mxu0 0.0
      %1762 = vmatmul.mubr.f32.gmra.mxu0 %v1600
      %v1763 = vpop.f32.mrf.mxu0
      %v1764 = vadd.f32 %v1594, %v1763
      %v1765 = vpop.f32.mrf.mxu0
      %1766 = vmatprep.mubr.f32.mxu0 0.0
      %1767 = vmatmul.mubr.f32.gmra.mxu0 %v1603
      %v1768 = vpop.f32.mrf.mxu0
      %v1769 = vadd.f32 %v1594, %v1768
      %v1770 = vpop.f32.mrf.mxu0
      %1771 = vmatprep.mubr.f32.mxu0 0.0
      %1772 = vmatmul.mubr.f32.gmra.mxu0 %v1606
      %v1773 = vpop.f32.mrf.mxu0
      %v1774 = vadd.f32 %v1594, %v1773
      %v1775 = vpop.f32.mrf.mxu0
      %1776 = vmatprep.mubr.f32.mxu0 0.0
      %1777 = vmatmul.mubr.f32.gmra.mxu0 %v1609
      %v1778 = vpop.f32.mrf.mxu0
      %v1779 = vadd.f32 %v1594, %v1778
      %v1780 = vpop.f32.mrf.mxu0
      %1781 = vmatprep.mubr.f32.mxu0 0.0
      %1782 = vmatmul.mubr.f32.gmra.mxu0 %v1612
      %v1783 = vpop.f32.mrf.mxu0
      %v1784 = vadd.f32 %v1594, %v1783
      %v1785 = vpop.f32.mrf.mxu0
      %1786 = vmatprep.mubr.f32.mxu0 0.0
      %1787 = vmatmul.mubr.f32.gmra.mxu0 %v1615
      %v1788 = vpop.f32.mrf.mxu0
      %v1789 = vadd.f32 %v1594, %v1788
      %v1790 = vpop.f32.mrf.mxu0
      %1791 = vmatprep.mubr.f32.mxu0 0.0
      %1792 = vmatmul.mubr.f32.gmra.mxu0 %v1618
      %v1793 = vpop.f32.mrf.mxu0
      %v1794 = vadd.f32 %v1594, %v1793
      %v1795 = vpop.f32.mrf.mxu0
      %1796 = vmatprep.mubr.f32.mxu0 0.0
      %1797 = vmatmul.mubr.f32.gmra.mxu0 %v1621
      %v1798 = vpop.f32.mrf.mxu0
      %v1799 = vadd.f32 %v1594, %v1798
      %v1800 = vpop.f32.mrf.mxu0
      %1801 = vmatprep.mubr.f32.mxu0 0.0
      %1802 = vmatmul.mubr.f32.gmra.mxu0 %v1624
      %v1803 = vpop.f32.mrf.mxu0
      %v1804 = vadd.f32 %v1594, %v1803
      %v1805 = vpop.f32.mrf.mxu0
      %1806 = vmatprep.mubr.f32.mxu0 0.0
      %1807 = vmatmul.mubr.f32.gmra.mxu0 %v1627
      %v1808 = vpop.f32.mrf.mxu0
      %v1809 = vadd.f32 %v1594, %v1808
      %v1810 = vpop.f32.mrf.mxu0
      %1811 = vmatprep.mubr.f32.mxu0 0.0
      %1812 = vmatmul.mubr.f32.gmra.mxu0 %v1630
      %v1813 = vpop.f32.mrf.mxu0
      %v1814 = vadd.f32 %v1594, %v1813
      %v1815 = vpop.f32.mrf.mxu0
      %1816 = vmatprep.mubr.f32.mxu0 0.0
      %1817 = vmatmul.mubr.f32.gmra.mxu0 %v1633
      %v1818 = vpop.f32.mrf.mxu0
      %v1819 = vadd.f32 %v1594, %v1818
      %v1820 = vpop.f32.mrf.mxu0
      %1821 = vmatprep.mubr.f32.mxu0 0.0
      %1822 = vmatmul.mubr.f32.gmra.mxu0 %v1636
      %v1823 = vpop.f32.mrf.mxu0
      %v1824 = vadd.f32 %v1594, %v1823
      %v1825 = vpop.f32.mrf.mxu0
      %1826 = vmatprep.mubr.f32.mxu0 0.0
      %1827 = vmatmul.mubr.f32.gmra.mxu0 %v1639
      %v1828 = vpop.f32.mrf.mxu0
      %v1829 = vadd.f32 %v1594, %v1828
      %v1830 = vpop.f32.mrf.mxu0
      %1831 = vmatprep.mubr.f32.mxu0 0.0
      %1832 = vmatmul.mubr.f32.gmra.mxu0 %v1642
      %v1833 = vpop.f32.mrf.mxu0
      %v1834 = vadd.f32 %v1594, %v1833
      %v1835 = vpop.f32.mrf.mxu0
      %1836 = vmatprep.mubr.f32.mxu0 0.0
      %1837 = vmatmul.mubr.f32.gmra.mxu0 %v1645
      %v1838 = vpop.f32.mrf.mxu0
      %v1839 = vadd.f32 %v1594, %v1838
      %v1840 = vpop.f32.mrf.mxu0
      %1841 = vmatprep.mubr.f32.mxu0 0.0
      %1842 = vmatmul.mubr.f32.gmra.mxu0 %v1648
      %v1843 = vpop.f32.mrf.mxu0
      %v1844 = vadd.f32 %v1594, %v1843
      %v1845 = vpop.f32.mrf.mxu0
      %1846 = vmatprep.mubr.f32.mxu0 0.0
      %1847 = vmatmul.mubr.f32.gmra.mxu0 %v1651
      %v1848 = vpop.f32.mrf.mxu0
      %v1849 = vadd.f32 %v1594, %v1848
      %v1850 = vpop.f32.mrf.mxu0
      %1851 = vmatprep.mubr.f32.mxu0 0.0
      %1852 = vmatmul.mubr.f32.gmra.mxu0 %v1654
      %v1853 = vpop.f32.mrf.mxu0
      %v1854 = vadd.f32 %v1594, %v1853
      %v1855 = vpop.f32.mrf.mxu0
      %1856 = vmatprep.mubr.f32.mxu0 0.0
      %1857 = vmatmul.mubr.f32.gmra.mxu0 %v1657
      %v1858 = vpop.f32.mrf.mxu0
      %v1859 = vadd.f32 %v1594, %v1858
      %v1860 = vpop.f32.mrf.mxu0
      %1861 = vmatprep.mubr.f32.mxu0 0.0
      %1862 = vmatmul.mubr.f32.gmra.mxu0 %v1660
      %v1863 = vpop.f32.mrf.mxu0
      %v1864 = vadd.f32 %v1594, %v1863
      %v1865 = vpop.f32.mrf.mxu0
      %1866 = vmatprep.mubr.f32.mxu0 0.0
      %1867 = vmatmul.mubr.f32.gmra.mxu0 %v1663
      %v1868 = vpop.f32.mrf.mxu0
      %v1869 = vadd.f32 %v1594, %v1868
      %v1870 = vpop.f32.mrf.mxu0
      %1871 = vmatprep.mubr.f32.mxu0 0.0
      %1872 = vmatmul.mubr.f32.gmra.mxu0 %v1666
      %v1873 = vpop.f32.mrf.mxu0
      %v1874 = vadd.f32 %v1594, %v1873
      %v1875 = vpop.f32.mrf.mxu0
      %1876 = vmatprep.mubr.f32.mxu0 0.0
      %1877 = vmatmul.mubr.f32.gmra.mxu0 %v1669
      %v1878 = vpop.f32.mrf.mxu0
      %v1879 = vadd.f32 %v1594, %v1878
      %v1880 = vpop.f32.mrf.mxu0
      %1881 = vmatprep.mubr.f32.mxu0 0.0
      %1882 = vmatmul.mubr.f32.gmra.mxu0 %v1672
      %v1883 = vpop.f32.mrf.mxu0
      %v1884 = vadd.f32 %v1594, %v1883
      %v1885 = vpop.f32.mrf.mxu0
      %1886 = vmatprep.mubr.f32.mxu0 0.0
      %1887 = vmatmul.mubr.f32.gmra.mxu0 %v1675
      %v1888 = vpop.f32.mrf.mxu0
      %v1889 = vadd.f32 %v1594, %v1888
      %v1890 = vpop.f32.mrf.mxu0
      %1891 = vmatprep.mubr.f32.mxu0 0.0
      %1892 = vmatmul.mubr.f32.gmra.mxu0 %v1678
      %v1893 = vpop.f32.mrf.mxu0
      %v1894 = vadd.f32 %v1594, %v1893
      %v1895 = vpop.f32.mrf.mxu0
      %1896 = vmatprep.mubr.f32.mxu0 0.0
      %1897 = vmatmul.mubr.f32.gmra.mxu0 %v1681
      %v1898 = vpop.f32.mrf.mxu0
      %v1899 = vadd.f32 %v1594, %v1898
      %v1900 = vpop.f32.mrf.mxu0
      %1901 = vmatprep.mubr.f32.mxu0 0.0
      %1902 = vmatmul.mubr.f32.gmra.mxu0 %v1684
      %v1903 = vpop.f32.mrf.mxu0
      %v1904 = vadd.f32 %v1594, %v1903
      %v1905 = vpop.f32.mrf.mxu0
      %1906 = vmatprep.mubr.f32.mxu0 0.0
      %1907 = vmatmul.mubr.f32.gmra.mxu0 %v1687
      %v1908 = vpop.f32.mrf.mxu0
      %v1909 = vadd.f32 %v1594, %v1908
      %v1910 = vpop.f32.mrf.mxu0
      %1911 = vmatprep.mubr.f32.mxu0 0.0
      %1912 = vmatmul.mubr.f32.gmra.mxu0 %v1690
      %v1913 = vpop.f32.mrf.mxu0
      %v1914 = vadd.f32 %v1594, %v1913
      %v1915 = vpop.f32.mrf.mxu0
      %1916 = vdwg.mxu0
      %v1917 = vmax.f32 %v1759, 0.0
      %v1918 = vmax.f32 %v1764, 0.0
      %v1919 = vmax.f32 %v1769, 0.0
      %v1920 = vmax.f32 %v1774, 0.0
      %v1921 = vmax.f32 %v1779, 0.0
      %v1922 = vmax.f32 %v1784, 0.0
      %v1923 = vmax.f32 %v1789, 0.0
      %v1924 = vmax.f32 %v1794, 0.0
      %v1925 = vmax.f32 %v1799, 0.0
      %v1926 = vmax.f32 %v1804, 0.0
      %v1927 = vmax.f32 %v1809, 0.0
      %v1928 = vmax.f32 %v1814, 0.0
      %v1929 = vmax.f32 %v1819, 0.0
      %v1930 = vmax.f32 %v1824, 0.0
      %v1931 = vmax.f32 %v1829, 0.0
      %v1932 = vmax.f32 %v1834, 0.0
      %v1933 = vmax.f32 %v1839, 0.0
      %v1934 = vmax.f32 %v1844, 0.0
      %v1935 = vmax.f32 %v1849, 0.0
      %v1936 = vmax.f32 %v1854, 0.0
      %v1937 = vmax.f32 %v1859, 0.0
      %v1938 = vmax.f32 %v1864, 0.0
      %v1939 = vmax.f32 %v1869, 0.0
      %v1940 = vmax.f32 %v1874, 0.0
      %v1941 = vmax.f32 %v1879, 0.0
      %v1942 = vmax.f32 %v1884, 0.0
      %v1943 = vmax.f32 %v1889, 0.0
      %v1944 = vmax.f32 %v1894, 0.0
      %v1945 = vmax.f32 %v1899, 0.0
      %v1946 = vmax.f32 %v1904, 0.0
      %v1947 = vmax.f32 %v1909, 0.0
      %v1948 = vmax.f32 %v1914, 0.0
      %v1949 = vld [vmem:[%s9] sm:$0xff]
      %v1950 = vld [vmem:[%s9 + $0x8] sm:$0xff]
      %v1951 = vld [vmem:[%s9 + $0x10] sm:$0xff]
      %v1952 = vld [vmem:[%s9 + $0x18] sm:$0xff]
      %v1953 = vld [vmem:[%s10] sm:$0x1]
      %v1955 = vlaneseq
      %v1956 = vshrl.u32 %v1955, 7
      %v1957 = vsub.s32 0, %v1956
      %v1958 = vrot.slane %v1953, %v1957
      %v1961 = vsel %vm867, %v1917, 0
      %v1964 = vsel %vm867, %v1918, 0
      %v1967 = vsel %vm867, %v1919, 0
      %v1970 = vsel %vm867, %v1920, 0
      %v1973 = vsel %vm867, %v1921, 0
      %v1976 = vsel %vm867, %v1922, 0
      %v1979 = vsel %vm867, %v1923, 0
      %v1982 = vsel %vm867, %v1924, 0
      %v1985 = vsel %vm867, %v1925, 0
      %v1988 = vsel %vm867, %v1926, 0
      %v1991 = vsel %vm867, %v1927, 0
      %v1994 = vsel %vm867, %v1928, 0
      %v1997 = vsel %vm867, %v1929, 0
      %v2000 = vsel %vm867, %v1930, 0
      %v2003 = vsel %vm867, %v1931, 0
      %v2006 = vsel %vm867, %v1932, 0
      %v2009 = vsel %vm867, %v1933, 0
      %v2012 = vsel %vm867, %v1934, 0
      %v2015 = vsel %vm867, %v1935, 0
      %v2018 = vsel %vm867, %v1936, 0
      %v2021 = vsel %vm867, %v1937, 0
      %v2024 = vsel %vm867, %v1938, 0
      %v2027 = vsel %vm867, %v1939, 0
      %v2030 = vsel %vm867, %v1940, 0
      %v2033 = vsel %vm867, %v1941, 0
      %v2036 = vsel %vm867, %v1942, 0
      %v2039 = vsel %vm867, %v1943, 0
      %v2042 = vsel %vm867, %v1944, 0
      %v2045 = vsel %vm867, %v1945, 0
      %v2048 = vsel %vm867, %v1946, 0
      %v2051 = vsel %vm867, %v1947, 0
      %v2054 = vsel %vm867, %v1948, 0
      %2056 = vmatprep.subr.mxu0 0.0
      %2057 = vmatpush1.msra.mxu0 0.0
      %2058 = vmatprep.subr.mxu0 0.0
      %2059 = vmatpush1.msra.mxu0 0.0
      %2060 = vmatprep.subr.mxu0 0.0
      %2061 = vmatpush1.msra.mxu0 0.0
      %2062 = vmatprep.subr.mxu0 0.0
      %2063 = vmatpush1.msra.mxu0 0.0
      %2064 = vmatprep.subr.mxu0 0.0
      %2065 = vmatpush1.msra.mxu0 0.0
      %2066 = vmatprep.subr.mxu0 0.0
      %2067 = vmatpush1.msra.mxu0 0.0
      %2068 = vmatprep.subr.mxu0 0.0
      %2069 = vmatpush1.msra.mxu0 0.0
      %2070 = vmatprep.subr.mxu0 0.0
      %2071 = vmatpush1.msra.mxu0 0.0
      %2072 = vmatprep.subr.mxu0 0.0
      %2073 = vmatpush1.msra.mxu0 0.0
      %2074 = vmatprep.subr.mxu0 0.0
      %2075 = vmatpush1.msra.mxu0 0.0
      %2076 = vmatprep.subr.mxu0 0.0
      %2077 = vmatpush1.msra.mxu0 0.0
      %2078 = vmatprep.subr.mxu0 0.0
      %2079 = vmatpush1.msra.mxu0 0.0
      %2080 = vmatprep.subr.mxu0 0.0
      %2081 = vmatpush1.msra.mxu0 %v1952
      %2082 = vmatprep.subr.mxu0 0.0
      %2083 = vmatpush1.msra.mxu0 %v1951
      %2084 = vmatprep.subr.mxu0 0.0
      %2085 = vmatpush1.msra.mxu0 %v1950
      %2086 = vmatprep.subr.mxu0 0.0
      %2087 = vmatpush1.msra.mxu0 %v1949
      %2088 = vmatprep.subr.mxu0 0.0
      %2089 = vmatpush2.msra.mxu0 0.0
      %2090 = vmatprep.subr.mxu0 0.0
      %2091 = vmatpush2.msra.mxu0 0.0
      %2092 = vmatprep.subr.mxu0 0.0
      %2093 = vmatpush2.msra.mxu0 0.0
      %2094 = vmatprep.subr.mxu0 0.0
      %2095 = vmatpush2.msra.mxu0 0.0
      %2096 = vmatprep.subr.mxu0 0.0
      %2097 = vmatpush2.msra.mxu0 0.0
      %2098 = vmatprep.subr.mxu0 0.0
      %2099 = vmatpush2.msra.mxu0 0.0
      %2100 = vmatprep.subr.mxu0 0.0
      %2101 = vmatpush2.msra.mxu0 0.0
      %2102 = vmatprep.subr.mxu0 0.0
      %2103 = vmatpush2.msra.mxu0 0.0
      %2104 = vmatprep.subr.mxu0 0.0
      %2105 = vmatpush2.msra.mxu0 0.0
      %2106 = vmatprep.subr.mxu0 0.0
      %2107 = vmatpush2.msra.mxu0 0.0
      %2108 = vmatprep.subr.mxu0 0.0
      %2109 = vmatpush2.msra.mxu0 0.0
      %2110 = vmatprep.subr.mxu0 0.0
      %2111 = vmatpush2.msra.mxu0 0.0
      %2112 = vmatprep.subr.mxu0 0.0
      %2113 = vmatpush2.msra.mxu0 0.0
      %2114 = vmatprep.subr.mxu0 0.0
      %2115 = vmatpush2.msra.mxu0 0.0
      %2116 = vmatprep.subr.mxu0 0.0
      %2117 = vmatpush2.msra.mxu0 0.0
      %2118 = vmatprep.subr.mxu0 0.0
      %2119 = vmatpush2.msra.mxu0 0.0
      %2120 = vmatprep.mubr.f32.mxu0 0.0
      %2121 = vmatmul.mubr.f32.gmra.mxu0 %v1961
      %v2122 = vpop.f32.mrf.mxu0
      %v2123 = vadd.f32 %v1958, %v2122
      %v2124 = vpop.f32.mrf.mxu0
      %2125 = vmatprep.mubr.f32.mxu0 0.0
      %2126 = vmatmul.mubr.f32.gmra.mxu0 %v1964
      %v2127 = vpop.f32.mrf.mxu0
      %v2128 = vadd.f32 %v1958, %v2127
      %v2129 = vpop.f32.mrf.mxu0
      %2130 = vmatprep.mubr.f32.mxu0 0.0
      %2131 = vmatmul.mubr.f32.gmra.mxu0 %v1967
      %v2132 = vpop.f32.mrf.mxu0
      %v2133 = vadd.f32 %v1958, %v2132
      %v2134 = vpop.f32.mrf.mxu0
      %2135 = vmatprep.mubr.f32.mxu0 0.0
      %2136 = vmatmul.mubr.f32.gmra.mxu0 %v1970
      %v2137 = vpop.f32.mrf.mxu0
      %v2138 = vadd.f32 %v1958, %v2137
      %v2139 = vpop.f32.mrf.mxu0
      %2140 = vmatprep.mubr.f32.mxu0 0.0
      %2141 = vmatmul.mubr.f32.gmra.mxu0 %v1973
      %v2142 = vpop.f32.mrf.mxu0
      %v2143 = vadd.f32 %v1958, %v2142
      %v2144 = vpop.f32.mrf.mxu0
      %2145 = vmatprep.mubr.f32.mxu0 0.0
      %2146 = vmatmul.mubr.f32.gmra.mxu0 %v1976
      %v2147 = vpop.f32.mrf.mxu0
      %v2148 = vadd.f32 %v1958, %v2147
      %v2149 = vpop.f32.mrf.mxu0
      %2150 = vmatprep.mubr.f32.mxu0 0.0
      %2151 = vmatmul.mubr.f32.gmra.mxu0 %v1979
      %v2152 = vpop.f32.mrf.mxu0
      %v2153 = vadd.f32 %v1958, %v2152
      %v2154 = vpop.f32.mrf.mxu0
      %2155 = vmatprep.mubr.f32.mxu0 0.0
      %2156 = vmatmul.mubr.f32.gmra.mxu0 %v1982
      %v2157 = vpop.f32.mrf.mxu0
      %v2158 = vadd.f32 %v1958, %v2157
      %v2159 = vpop.f32.mrf.mxu0
      %2160 = vmatprep.mubr.f32.mxu0 0.0
      %2161 = vmatmul.mubr.f32.gmra.mxu0 %v1985
      %v2162 = vpop.f32.mrf.mxu0
      %v2163 = vadd.f32 %v1958, %v2162
      %v2164 = vpop.f32.mrf.mxu0
      %2165 = vmatprep.mubr.f32.mxu0 0.0
      %2166 = vmatmul.mubr.f32.gmra.mxu0 %v1988
      %v2167 = vpop.f32.mrf.mxu0
      %v2168 = vadd.f32 %v1958, %v2167
      %v2169 = vpop.f32.mrf.mxu0
      %2170 = vmatprep.mubr.f32.mxu0 0.0
      %2171 = vmatmul.mubr.f32.gmra.mxu0 %v1991
      %v2172 = vpop.f32.mrf.mxu0
      %v2173 = vadd.f32 %v1958, %v2172
      %v2174 = vpop.f32.mrf.mxu0
      %2175 = vmatprep.mubr.f32.mxu0 0.0
      %2176 = vmatmul.mubr.f32.gmra.mxu0 %v1994
      %v2177 = vpop.f32.mrf.mxu0
      %v2178 = vadd.f32 %v1958, %v2177
      %v2179 = vpop.f32.mrf.mxu0
      %2180 = vmatprep.mubr.f32.mxu0 0.0
      %2181 = vmatmul.mubr.f32.gmra.mxu0 %v1997
      %v2182 = vpop.f32.mrf.mxu0
      %v2183 = vadd.f32 %v1958, %v2182
      %v2184 = vpop.f32.mrf.mxu0
      %2185 = vmatprep.mubr.f32.mxu0 0.0
      %2186 = vmatmul.mubr.f32.gmra.mxu0 %v2000
      %v2187 = vpop.f32.mrf.mxu0
      %v2188 = vadd.f32 %v1958, %v2187
      %v2189 = vpop.f32.mrf.mxu0
      %2190 = vmatprep.mubr.f32.mxu0 0.0
      %2191 = vmatmul.mubr.f32.gmra.mxu0 %v2003
      %v2192 = vpop.f32.mrf.mxu0
      %v2193 = vadd.f32 %v1958, %v2192
      %v2194 = vpop.f32.mrf.mxu0
      %2195 = vmatprep.mubr.f32.mxu0 0.0
      %2196 = vmatmul.mubr.f32.gmra.mxu0 %v2006
      %v2197 = vpop.f32.mrf.mxu0
      %v2198 = vadd.f32 %v1958, %v2197
      %v2199 = vpop.f32.mrf.mxu0
      %2200 = vmatprep.mubr.f32.mxu0 0.0
      %2201 = vmatmul.mubr.f32.gmra.mxu0 %v2009
      %v2202 = vpop.f32.mrf.mxu0
      %v2203 = vadd.f32 %v1958, %v2202
      %v2204 = vpop.f32.mrf.mxu0
      %2205 = vmatprep.mubr.f32.mxu0 0.0
      %2206 = vmatmul.mubr.f32.gmra.mxu0 %v2012
      %v2207 = vpop.f32.mrf.mxu0
      %v2208 = vadd.f32 %v1958, %v2207
      %v2209 = vpop.f32.mrf.mxu0
      %2210 = vmatprep.mubr.f32.mxu0 0.0
      %2211 = vmatmul.mubr.f32.gmra.mxu0 %v2015
      %v2212 = vpop.f32.mrf.mxu0
      %v2213 = vadd.f32 %v1958, %v2212
      %v2214 = vpop.f32.mrf.mxu0
      %2215 = vmatprep.mubr.f32.mxu0 0.0
      %2216 = vmatmul.mubr.f32.gmra.mxu0 %v2018
      %v2217 = vpop.f32.mrf.mxu0
      %v2218 = vadd.f32 %v1958, %v2217
      %v2219 = vpop.f32.mrf.mxu0
      %2220 = vmatprep.mubr.f32.mxu0 0.0
      %2221 = vmatmul.mubr.f32.gmra.mxu0 %v2021
      %v2222 = vpop.f32.mrf.mxu0
      %v2223 = vadd.f32 %v1958, %v2222
      %v2224 = vpop.f32.mrf.mxu0
      %2225 = vmatprep.mubr.f32.mxu0 0.0
      %2226 = vmatmul.mubr.f32.gmra.mxu0 %v2024
      %v2227 = vpop.f32.mrf.mxu0
      %v2228 = vadd.f32 %v1958, %v2227
      %v2229 = vpop.f32.mrf.mxu0
      %2230 = vmatprep.mubr.f32.mxu0 0.0
      %2231 = vmatmul.mubr.f32.gmra.mxu0 %v2027
      %v2232 = vpop.f32.mrf.mxu0
      %v2233 = vadd.f32 %v1958, %v2232
      %v2234 = vpop.f32.mrf.mxu0
      %2235 = vmatprep.mubr.f32.mxu0 0.0
      %2236 = vmatmul.mubr.f32.gmra.mxu0 %v2030
      %v2237 = vpop.f32.mrf.mxu0
      %v2238 = vadd.f32 %v1958, %v2237
      %v2239 = vpop.f32.mrf.mxu0
      %2240 = vmatprep.mubr.f32.mxu0 0.0
      %2241 = vmatmul.mubr.f32.gmra.mxu0 %v2033
      %v2242 = vpop.f32.mrf.mxu0
      %v2243 = vadd.f32 %v1958, %v2242
      %v2244 = vpop.f32.mrf.mxu0
      %2245 = vmatprep.mubr.f32.mxu0 0.0
      %2246 = vmatmul.mubr.f32.gmra.mxu0 %v2036
      %v2247 = vpop.f32.mrf.mxu0
      %v2248 = vadd.f32 %v1958, %v2247
      %v2249 = vpop.f32.mrf.mxu0
      %2250 = vmatprep.mubr.f32.mxu0 0.0
      %2251 = vmatmul.mubr.f32.gmra.mxu0 %v2039
      %v2252 = vpop.f32.mrf.mxu0
      %v2253 = vadd.f32 %v1958, %v2252
      %v2254 = vpop.f32.mrf.mxu0
      %2255 = vmatprep.mubr.f32.mxu0 0.0
      %2256 = vmatmul.mubr.f32.gmra.mxu0 %v2042
      %v2257 = vpop.f32.mrf.mxu0
      %v2258 = vadd.f32 %v1958, %v2257
      %v2259 = vpop.f32.mrf.mxu0
      %2260 = vmatprep.mubr.f32.mxu0 0.0
      %2261 = vmatmul.mubr.f32.gmra.mxu0 %v2045
      %v2262 = vpop.f32.mrf.mxu0
      %v2263 = vadd.f32 %v1958, %v2262
      %v2264 = vpop.f32.mrf.mxu0
      %2265 = vmatprep.mubr.f32.mxu0 0.0
      %2266 = vmatmul.mubr.f32.gmra.mxu0 %v2048
      %v2267 = vpop.f32.mrf.mxu0
      %v2268 = vadd.f32 %v1958, %v2267
      %v2269 = vpop.f32.mrf.mxu0
      %2270 = vmatprep.mubr.f32.mxu0 0.0
      %2271 = vmatmul.mubr.f32.gmra.mxu0 %v2051
      %v2272 = vpop.f32.mrf.mxu0
      %v2273 = vadd.f32 %v1958, %v2272
      %v2274 = vpop.f32.mrf.mxu0
      %2275 = vmatprep.mubr.f32.mxu0 0.0
      %2276 = vmatmul.mubr.f32.gmra.mxu0 %v2054
      %v2277 = vpop.f32.mrf.mxu0
      %v2278 = vadd.f32 %v1958, %v2277
      %v2279 = vpop.f32.mrf.mxu0
      %2280 = vdwg.mxu0
      %v2281 = vtanh.pop %v2123
      %v2282 = vtanh.pop %v2128
      %v2283 = vtanh.pop %v2133
      %v2284 = vtanh.pop %v2138
      %v2285 = vtanh.pop %v2143
      %v2286 = vtanh.pop %v2148
      %v2287 = vtanh.pop %v2153
      %v2288 = vtanh.pop %v2158
      %v2289 = vtanh.pop %v2163
      %v2290 = vtanh.pop %v2168
      %v2291 = vtanh.pop %v2173
      %v2292 = vtanh.pop %v2178
      %v2293 = vtanh.pop %v2183
      %v2294 = vtanh.pop %v2188
      %v2295 = vtanh.pop %v2193
      %v2296 = vtanh.pop %v2198
      %v2297 = vtanh.pop %v2203
      %v2298 = vtanh.pop %v2208
      %v2299 = vtanh.pop %v2213
      %v2300 = vtanh.pop %v2218
      %v2301 = vtanh.pop %v2223
      %v2302 = vtanh.pop %v2228
      %v2303 = vtanh.pop %v2233
      %v2304 = vtanh.pop %v2238
      %v2305 = vtanh.pop %v2243
      %v2306 = vtanh.pop %v2248
      %v2307 = vtanh.pop %v2253
      %v2308 = vtanh.pop %v2258
      %v2309 = vtanh.pop %v2263
      %v2310 = vtanh.pop %v2268
      %v2311 = vtanh.pop %v2273
      %v2312 = vtanh.pop %v2278
      %v2313 = vmul.f32 %v2281, 0.6
      %v2314 = vmul.f32 %v2282, 0.6
      %v2315 = vmul.f32 %v2283, 0.6
      %v2316 = vmul.f32 %v2284, 0.6
      %v2317 = vmul.f32 %v2285, 0.6
      %v2318 = vmul.f32 %v2286, 0.6
      %v2319 = vmul.f32 %v2287, 0.6
      %v2320 = vmul.f32 %v2288, 0.6
      %v2321 = vmul.f32 %v2289, 0.6
      %v2322 = vmul.f32 %v2290, 0.6
      %v2323 = vmul.f32 %v2291, 0.6
      %v2324 = vmul.f32 %v2292, 0.6
      %v2325 = vmul.f32 %v2293, 0.6
      %v2326 = vmul.f32 %v2294, 0.6
      %v2327 = vmul.f32 %v2295, 0.6
      %v2328 = vmul.f32 %v2296, 0.6
      %v2329 = vmul.f32 %v2297, 0.6
      %v2330 = vmul.f32 %v2298, 0.6
      %v2331 = vmul.f32 %v2299, 0.6
      %v2332 = vmul.f32 %v2300, 0.6
      %v2333 = vmul.f32 %v2301, 0.6
      %v2334 = vmul.f32 %v2302, 0.6
      %v2335 = vmul.f32 %v2303, 0.6
      %v2336 = vmul.f32 %v2304, 0.6
      %v2337 = vmul.f32 %v2305, 0.6
      %v2338 = vmul.f32 %v2306, 0.6
      %v2339 = vmul.f32 %v2307, 0.6
      %v2340 = vmul.f32 %v2308, 0.6
      %v2341 = vmul.f32 %v2309, 0.6
      %v2342 = vmul.f32 %v2310, 0.6
      %v2343 = vmul.f32 %v2311, 0.6
      %v2344 = vmul.f32 %v2312, 0.6
      %v2345 = vld [vmem:[%s11] sm:$0x1]
      %v2347 = vlaneseq
      %v2348 = vshrl.u32 %v2347, 7
      %v2349 = vsub.s32 0, %v2348
      %v2350 = vrot.slane %v2345, %v2349
      %v2352 = vmul.f32 %v2350, %v2281
      %v2353 = vmul.f32 %v2350, %v2282
      %v2354 = vmul.f32 %v2350, %v2283
      %v2355 = vmul.f32 %v2350, %v2284
      %v2356 = vmul.f32 %v2350, %v2285
      %v2357 = vmul.f32 %v2350, %v2286
      %v2358 = vmul.f32 %v2350, %v2287
      %v2359 = vmul.f32 %v2350, %v2288
      %v2360 = vmul.f32 %v2350, %v2289
      %v2361 = vmul.f32 %v2350, %v2290
      %v2362 = vmul.f32 %v2350, %v2291
      %v2363 = vmul.f32 %v2350, %v2292
      %v2364 = vmul.f32 %v2350, %v2293
      %v2365 = vmul.f32 %v2350, %v2294
      %v2366 = vmul.f32 %v2350, %v2295
      %v2367 = vmul.f32 %v2350, %v2296
      %v2368 = vmul.f32 %v2350, %v2297
      %v2369 = vmul.f32 %v2350, %v2298
      %v2370 = vmul.f32 %v2350, %v2299
      %v2371 = vmul.f32 %v2350, %v2300
      %v2372 = vmul.f32 %v2350, %v2301
      %v2373 = vmul.f32 %v2350, %v2302
      %v2374 = vmul.f32 %v2350, %v2303
      %v2375 = vmul.f32 %v2350, %v2304
      %v2376 = vmul.f32 %v2350, %v2305
      %v2377 = vmul.f32 %v2350, %v2306
      %v2378 = vmul.f32 %v2350, %v2307
      %v2379 = vmul.f32 %v2350, %v2308
      %v2380 = vmul.f32 %v2350, %v2309
      %v2381 = vmul.f32 %v2350, %v2310
      %v2382 = vmul.f32 %v2350, %v2311
      %v2383 = vmul.f32 %v2350, %v2312
      %v2384 = vmul.f32 %v2313, %v458
      %v2385 = vmul.f32 %v2314, %v459
      %v2386 = vmul.f32 %v2315, %v460
      %v2387 = vmul.f32 %v2316, %v461
      %v2388 = vmul.f32 %v2317, %v462
      %v2389 = vmul.f32 %v2318, %v463
      %v2390 = vmul.f32 %v2319, %v464
      %v2391 = vmul.f32 %v2320, %v465
      %v2392 = vmul.f32 %v2321, %v466
      %v2393 = vmul.f32 %v2322, %v467
      %v2394 = vmul.f32 %v2323, %v468
      %v2395 = vmul.f32 %v2324, %v469
      %v2396 = vmul.f32 %v2325, %v470
      %v2397 = vmul.f32 %v2326, %v471
      %v2398 = vmul.f32 %v2327, %v472
      %v2399 = vmul.f32 %v2328, %v473
      %v2400 = vmul.f32 %v2329, %v474
      %v2401 = vmul.f32 %v2330, %v475
      %v2402 = vmul.f32 %v2331, %v476
      %v2403 = vmul.f32 %v2332, %v477
      %v2404 = vmul.f32 %v2333, %v478
      %v2405 = vmul.f32 %v2334, %v479
      %v2406 = vmul.f32 %v2335, %v480
      %v2407 = vmul.f32 %v2336, %v481
      %v2408 = vmul.f32 %v2337, %v482
      %v2409 = vmul.f32 %v2338, %v483
      %v2410 = vmul.f32 %v2339, %v484
      %v2411 = vmul.f32 %v2340, %v485
      %v2412 = vmul.f32 %v2341, %v486
      %v2413 = vmul.f32 %v2342, %v487
      %v2414 = vmul.f32 %v2343, %v488
      %v2415 = vmul.f32 %v2344, %v489
      %v2416 = vadd.f32 %v458, %v2384
      %v2417 = vadd.f32 %v459, %v2385
      %v2418 = vadd.f32 %v460, %v2386
      %v2419 = vadd.f32 %v461, %v2387
      %v2420 = vadd.f32 %v462, %v2388
      %v2421 = vadd.f32 %v463, %v2389
      %v2422 = vadd.f32 %v464, %v2390
      %v2423 = vadd.f32 %v465, %v2391
      %v2424 = vadd.f32 %v466, %v2392
      %v2425 = vadd.f32 %v467, %v2393
      %v2426 = vadd.f32 %v468, %v2394
      %v2427 = vadd.f32 %v469, %v2395
      %v2428 = vadd.f32 %v470, %v2396
      %v2429 = vadd.f32 %v471, %v2397
      %v2430 = vadd.f32 %v472, %v2398
      %v2431 = vadd.f32 %v473, %v2399
      %v2432 = vadd.f32 %v474, %v2400
      %v2433 = vadd.f32 %v475, %v2401
      %v2434 = vadd.f32 %v476, %v2402
      %v2435 = vadd.f32 %v477, %v2403
      %v2436 = vadd.f32 %v478, %v2404
      %v2437 = vadd.f32 %v479, %v2405
      %v2438 = vadd.f32 %v480, %v2406
      %v2439 = vadd.f32 %v481, %v2407
      %v2440 = vadd.f32 %v482, %v2408
      %v2441 = vadd.f32 %v483, %v2409
      %v2442 = vadd.f32 %v484, %v2410
      %v2443 = vadd.f32 %v485, %v2411
      %v2444 = vadd.f32 %v486, %v2412
      %v2445 = vadd.f32 %v487, %v2413
      %v2446 = vadd.f32 %v488, %v2414
      %v2447 = vadd.f32 %v489, %v2415
      %2480 = vrot.lane.b32.xlu0 %v2352, 4
      %v2481 = vpop.permute.xlu0 %2480
      %2482 = vrot.lane.b32.xlu0 %v2353, 4
      %v2483 = vpop.permute.xlu0 %2482
      %2484 = vrot.lane.b32.xlu0 %v2354, 4
      %v2485 = vpop.permute.xlu0 %2484
      %2486 = vrot.lane.b32.xlu0 %v2355, 4
      %v2487 = vpop.permute.xlu0 %2486
      %2488 = vrot.lane.b32.xlu0 %v2356, 4
      %v2489 = vpop.permute.xlu0 %2488
      %2490 = vrot.lane.b32.xlu0 %v2357, 4
      %v2491 = vpop.permute.xlu0 %2490
      %2492 = vrot.lane.b32.xlu0 %v2358, 4
      %v2493 = vpop.permute.xlu0 %2492
      %2494 = vrot.lane.b32.xlu0 %v2359, 4
      %v2495 = vpop.permute.xlu0 %2494
      %2496 = vrot.lane.b32.xlu0 %v2360, 4
      %v2497 = vpop.permute.xlu0 %2496
      %2498 = vrot.lane.b32.xlu0 %v2361, 4
      %v2499 = vpop.permute.xlu0 %2498
      %2500 = vrot.lane.b32.xlu0 %v2362, 4
      %v2501 = vpop.permute.xlu0 %2500
      %2502 = vrot.lane.b32.xlu0 %v2363, 4
      %v2503 = vpop.permute.xlu0 %2502
      %2504 = vrot.lane.b32.xlu0 %v2364, 4
      %v2505 = vpop.permute.xlu0 %2504
      %2506 = vrot.lane.b32.xlu0 %v2365, 4
      %v2507 = vpop.permute.xlu0 %2506
      %2508 = vrot.lane.b32.xlu0 %v2366, 4
      %v2509 = vpop.permute.xlu0 %2508
      %2510 = vrot.lane.b32.xlu0 %v2367, 4
      %v2511 = vpop.permute.xlu0 %2510
      %2512 = vrot.lane.b32.xlu0 %v2368, 4
      %v2513 = vpop.permute.xlu0 %2512
      %2514 = vrot.lane.b32.xlu0 %v2369, 4
      %v2515 = vpop.permute.xlu0 %2514
      %2516 = vrot.lane.b32.xlu0 %v2370, 4
      %v2517 = vpop.permute.xlu0 %2516
      %2518 = vrot.lane.b32.xlu0 %v2371, 4
      %v2519 = vpop.permute.xlu0 %2518
      %2520 = vrot.lane.b32.xlu0 %v2372, 4
      %v2521 = vpop.permute.xlu0 %2520
      %2522 = vrot.lane.b32.xlu0 %v2373, 4
      %v2523 = vpop.permute.xlu0 %2522
      %2524 = vrot.lane.b32.xlu0 %v2374, 4
      %v2525 = vpop.permute.xlu0 %2524
      %2526 = vrot.lane.b32.xlu0 %v2375, 4
      %v2527 = vpop.permute.xlu0 %2526
      %2528 = vrot.lane.b32.xlu0 %v2376, 4
      %v2529 = vpop.permute.xlu0 %2528
      %2530 = vrot.lane.b32.xlu0 %v2377, 4
      %v2531 = vpop.permute.xlu0 %2530
      %2532 = vrot.lane.b32.xlu0 %v2378, 4
      %v2533 = vpop.permute.xlu0 %2532
      %2534 = vrot.lane.b32.xlu0 %v2379, 4
      %v2535 = vpop.permute.xlu0 %2534
      %2536 = vrot.lane.b32.xlu0 %v2380, 4
      %v2537 = vpop.permute.xlu0 %2536
      %2538 = vrot.lane.b32.xlu0 %v2381, 4
      %v2539 = vpop.permute.xlu0 %2538
      %2540 = vrot.lane.b32.xlu0 %v2382, 4
      %v2541 = vpop.permute.xlu0 %2540
      %2542 = vrot.lane.b32.xlu0 %v2383, 4
      %v2543 = vpop.permute.xlu0 %2542
      %v2576 = vadd.f32 %v2416, %v2481
      %v2577 = vadd.f32 %v2417, %v2483
      %v2578 = vadd.f32 %v2418, %v2485
      %v2579 = vadd.f32 %v2419, %v2487
      %v2580 = vadd.f32 %v2420, %v2489
      %v2581 = vadd.f32 %v2421, %v2491
      %v2582 = vadd.f32 %v2422, %v2493
      %v2583 = vadd.f32 %v2423, %v2495
      %v2584 = vadd.f32 %v2424, %v2497
      %v2585 = vadd.f32 %v2425, %v2499
      %v2586 = vadd.f32 %v2426, %v2501
      %v2587 = vadd.f32 %v2427, %v2503
      %v2588 = vadd.f32 %v2428, %v2505
      %v2589 = vadd.f32 %v2429, %v2507
      %v2590 = vadd.f32 %v2430, %v2509
      %v2591 = vadd.f32 %v2431, %v2511
      %v2592 = vadd.f32 %v2432, %v2513
      %v2593 = vadd.f32 %v2433, %v2515
      %v2594 = vadd.f32 %v2434, %v2517
      %v2595 = vadd.f32 %v2435, %v2519
      %v2596 = vadd.f32 %v2436, %v2521
      %v2597 = vadd.f32 %v2437, %v2523
      %v2598 = vadd.f32 %v2438, %v2525
      %v2599 = vadd.f32 %v2439, %v2527
      %v2600 = vadd.f32 %v2440, %v2529
      %v2601 = vadd.f32 %v2441, %v2531
      %v2602 = vadd.f32 %v2442, %v2533
      %v2603 = vadd.f32 %v2443, %v2535
      %v2604 = vadd.f32 %v2444, %v2537
      %v2605 = vadd.f32 %v2445, %v2539
      %v2606 = vadd.f32 %v2446, %v2541
      %v2607 = vadd.f32 %v2447, %v2543
      %v2608 = vsel %vm498, %v458, %v2576
      %v2609 = vsel %vm498, %v459, %v2577
      %v2610 = vsel %vm498, %v460, %v2578
      %v2611 = vsel %vm498, %v461, %v2579
      %v2612 = vsel %vm498, %v462, %v2580
      %v2613 = vsel %vm498, %v463, %v2581
      %v2614 = vsel %vm498, %v464, %v2582
      %v2615 = vsel %vm498, %v465, %v2583
      %v2616 = vsel %vm498, %v466, %v2584
      %v2617 = vsel %vm498, %v467, %v2585
      %v2618 = vsel %vm498, %v468, %v2586
      %v2619 = vsel %vm498, %v469, %v2587
      %v2620 = vsel %vm498, %v470, %v2588
      %v2621 = vsel %vm498, %v471, %v2589
      %v2622 = vsel %vm498, %v472, %v2590
      %v2623 = vsel %vm498, %v473, %v2591
      %v2624 = vsel %vm498, %v474, %v2592
      %v2625 = vsel %vm498, %v475, %v2593
      %v2626 = vsel %vm498, %v476, %v2594
      %v2627 = vsel %vm498, %v477, %v2595
      %v2628 = vsel %vm498, %v478, %v2596
      %v2629 = vsel %vm498, %v479, %v2597
      %v2630 = vsel %vm498, %v480, %v2598
      %v2631 = vsel %vm498, %v481, %v2599
      %v2632 = vsel %vm498, %v482, %v2600
      %v2633 = vsel %vm498, %v483, %v2601
      %v2634 = vsel %vm498, %v484, %v2602
      %v2635 = vsel %vm498, %v485, %v2603
      %v2636 = vsel %vm498, %v486, %v2604
      %v2637 = vsel %vm498, %v487, %v2605
      %v2638 = vsel %vm498, %v488, %v2606
      %v2639 = vsel %vm498, %v489, %v2607
      %vm2640 = vcmask 64512
      %2641 = vst.msk [vmem:[%s450] sm:$0xff] %vm2640, %v2608
      %2642 = vst.msk [vmem:[%s450 + $0x8] sm:$0xff] %vm2640, %v2609
      %2643 = vst.msk [vmem:[%s450 + $0x10] sm:$0xff] %vm2640, %v2610
      %2644 = vst.msk [vmem:[%s450 + $0x18] sm:$0xff] %vm2640, %v2611
      %2645 = vst.msk [vmem:[%s450 + $0x20] sm:$0xff] %vm2640, %v2612
      %2646 = vst.msk [vmem:[%s450 + $0x28] sm:$0xff] %vm2640, %v2613
      %2647 = vst.msk [vmem:[%s450 + $0x30] sm:$0xff] %vm2640, %v2614
      %2648 = vst.msk [vmem:[%s450 + $0x38] sm:$0xff] %vm2640, %v2615
      %2649 = vst.msk [vmem:[%s450 + $0x40] sm:$0xff] %vm2640, %v2616
      %2650 = vst.msk [vmem:[%s450 + $0x48] sm:$0xff] %vm2640, %v2617
      %2651 = vst.msk [vmem:[%s450 + $0x50] sm:$0xff] %vm2640, %v2618
      %2652 = vst.msk [vmem:[%s450 + $0x58] sm:$0xff] %vm2640, %v2619
      %2653 = vst.msk [vmem:[%s450 + $0x60] sm:$0xff] %vm2640, %v2620
      %2654 = vst.msk [vmem:[%s450 + $0x68] sm:$0xff] %vm2640, %v2621
      %2655 = vst.msk [vmem:[%s450 + $0x70] sm:$0xff] %vm2640, %v2622
      %2656 = vst.msk [vmem:[%s450 + $0x78] sm:$0xff] %vm2640, %v2623
      %2657 = vst.msk [vmem:[%s450 + $0x80] sm:$0xff] %vm2640, %v2624
      %2658 = vst.msk [vmem:[%s450 + $0x88] sm:$0xff] %vm2640, %v2625
      %2659 = vst.msk [vmem:[%s450 + $0x90] sm:$0xff] %vm2640, %v2626
      %2660 = vst.msk [vmem:[%s450 + $0x98] sm:$0xff] %vm2640, %v2627
      %2661 = vst.msk [vmem:[%s450 + $0xa0] sm:$0xff] %vm2640, %v2628
      %2662 = vst.msk [vmem:[%s450 + $0xa8] sm:$0xff] %vm2640, %v2629
      %2663 = vst.msk [vmem:[%s450 + $0xb0] sm:$0xff] %vm2640, %v2630
      %2664 = vst.msk [vmem:[%s450 + $0xb8] sm:$0xff] %vm2640, %v2631
      %2665 = vst.msk [vmem:[%s450 + $0xc0] sm:$0xff] %vm2640, %v2632
      %2666 = vst.msk [vmem:[%s450 + $0xc8] sm:$0xff] %vm2640, %v2633
      %2667 = vst.msk [vmem:[%s450 + $0xd0] sm:$0xff] %vm2640, %v2634
      %2668 = vst.msk [vmem:[%s450 + $0xd8] sm:$0xff] %vm2640, %v2635
      %2669 = vst.msk [vmem:[%s450 + $0xe0] sm:$0xff] %vm2640, %v2636
      %2670 = vst.msk [vmem:[%s450 + $0xe8] sm:$0xff] %vm2640, %v2637
      %2671 = vst.msk [vmem:[%s450 + $0xf0] sm:$0xff] %vm2640, %v2638
      %2672 = vst.msk [vmem:[%s450 + $0xf8] sm:$0xff] %vm2640, %v2639
      %v2673 = vadd.f32 %v2313, 1.0
      %v2674 = vlog2.pop %v2673
      %v2675 = vmul.f32 %v2674, 0.6931472
      %v2676 = vmul.f32 -0.5, %v2313
      %v2677 = vadd.f32 %v2676, 1.0
      %v2678 = vmul.f32 %v2677, %v2313
      %v2679 = vand.u32 2147483647, %v2313
      %vm2680 = vcmp.lt.f32.partialorder %v2679, 0.0004427343
      %v2681 = vsel %vm2680, %v2678, %v2675
      %v2682 = vadd.f32 %v2314, 1.0
      %v2683 = vlog2.pop %v2682
      %v2684 = vmul.f32 %v2683, 0.6931472
      %v2685 = vmul.f32 -0.5, %v2314
      %v2686 = vadd.f32 %v2685, 1.0
      %v2687 = vmul.f32 %v2686, %v2314
      %v2688 = vand.u32 2147483647, %v2314
      %vm2689 = vcmp.lt.f32.partialorder %v2688, 0.0004427343
      %v2690 = vsel %vm2689, %v2687, %v2684
      %v2691 = vadd.f32 %v2315, 1.0
      %v2692 = vlog2.pop %v2691
      %v2693 = vmul.f32 %v2692, 0.6931472
      %v2694 = vmul.f32 -0.5, %v2315
      %v2695 = vadd.f32 %v2694, 1.0
      %v2696 = vmul.f32 %v2695, %v2315
      %v2697 = vand.u32 2147483647, %v2315
      %vm2698 = vcmp.lt.f32.partialorder %v2697, 0.0004427343
      %v2699 = vsel %vm2698, %v2696, %v2693
      %v2700 = vadd.f32 %v2316, 1.0
      %v2701 = vlog2.pop %v2700
      %v2702 = vmul.f32 %v2701, 0.6931472
      %v2703 = vmul.f32 -0.5, %v2316
      %v2704 = vadd.f32 %v2703, 1.0
      %v2705 = vmul.f32 %v2704, %v2316
      %v2706 = vand.u32 2147483647, %v2316
      %vm2707 = vcmp.lt.f32.partialorder %v2706, 0.0004427343
      %v2708 = vsel %vm2707, %v2705, %v2702
      %v2709 = vadd.f32 %v2317, 1.0
      %v2710 = vlog2.pop %v2709
      %v2711 = vmul.f32 %v2710, 0.6931472
      %v2712 = vmul.f32 -0.5, %v2317
      %v2713 = vadd.f32 %v2712, 1.0
      %v2714 = vmul.f32 %v2713, %v2317
      %v2715 = vand.u32 2147483647, %v2317
      %vm2716 = vcmp.lt.f32.partialorder %v2715, 0.0004427343
      %v2717 = vsel %vm2716, %v2714, %v2711
      %v2718 = vadd.f32 %v2318, 1.0
      %v2719 = vlog2.pop %v2718
      %v2720 = vmul.f32 %v2719, 0.6931472
      %v2721 = vmul.f32 -0.5, %v2318
      %v2722 = vadd.f32 %v2721, 1.0
      %v2723 = vmul.f32 %v2722, %v2318
      %v2724 = vand.u32 2147483647, %v2318
      %vm2725 = vcmp.lt.f32.partialorder %v2724, 0.0004427343
      %v2726 = vsel %vm2725, %v2723, %v2720
      %v2727 = vadd.f32 %v2319, 1.0
      %v2728 = vlog2.pop %v2727
      %v2729 = vmul.f32 %v2728, 0.6931472
      %v2730 = vmul.f32 -0.5, %v2319
      %v2731 = vadd.f32 %v2730, 1.0
      %v2732 = vmul.f32 %v2731, %v2319
      %v2733 = vand.u32 2147483647, %v2319
      %vm2734 = vcmp.lt.f32.partialorder %v2733, 0.0004427343
      %v2735 = vsel %vm2734, %v2732, %v2729
      %v2736 = vadd.f32 %v2320, 1.0
      %v2737 = vlog2.pop %v2736
      %v2738 = vmul.f32 %v2737, 0.6931472
      %v2739 = vmul.f32 -0.5, %v2320
      %v2740 = vadd.f32 %v2739, 1.0
      %v2741 = vmul.f32 %v2740, %v2320
      %v2742 = vand.u32 2147483647, %v2320
      %vm2743 = vcmp.lt.f32.partialorder %v2742, 0.0004427343
      %v2744 = vsel %vm2743, %v2741, %v2738
      %v2745 = vadd.f32 %v2321, 1.0
      %v2746 = vlog2.pop %v2745
      %v2747 = vmul.f32 %v2746, 0.6931472
      %v2748 = vmul.f32 -0.5, %v2321
      %v2749 = vadd.f32 %v2748, 1.0
      %v2750 = vmul.f32 %v2749, %v2321
      %v2751 = vand.u32 2147483647, %v2321
      %vm2752 = vcmp.lt.f32.partialorder %v2751, 0.0004427343
      %v2753 = vsel %vm2752, %v2750, %v2747
      %v2754 = vadd.f32 %v2322, 1.0
      %v2755 = vlog2.pop %v2754
      %v2756 = vmul.f32 %v2755, 0.6931472
      %v2757 = vmul.f32 -0.5, %v2322
      %v2758 = vadd.f32 %v2757, 1.0
      %v2759 = vmul.f32 %v2758, %v2322
      %v2760 = vand.u32 2147483647, %v2322
      %vm2761 = vcmp.lt.f32.partialorder %v2760, 0.0004427343
      %v2762 = vsel %vm2761, %v2759, %v2756
      %v2763 = vadd.f32 %v2323, 1.0
      %v2764 = vlog2.pop %v2763
      %v2765 = vmul.f32 %v2764, 0.6931472
      %v2766 = vmul.f32 -0.5, %v2323
      %v2767 = vadd.f32 %v2766, 1.0
      %v2768 = vmul.f32 %v2767, %v2323
      %v2769 = vand.u32 2147483647, %v2323
      %vm2770 = vcmp.lt.f32.partialorder %v2769, 0.0004427343
      %v2771 = vsel %vm2770, %v2768, %v2765
      %v2772 = vadd.f32 %v2324, 1.0
      %v2773 = vlog2.pop %v2772
      %v2774 = vmul.f32 %v2773, 0.6931472
      %v2775 = vmul.f32 -0.5, %v2324
      %v2776 = vadd.f32 %v2775, 1.0
      %v2777 = vmul.f32 %v2776, %v2324
      %v2778 = vand.u32 2147483647, %v2324
      %vm2779 = vcmp.lt.f32.partialorder %v2778, 0.0004427343
      %v2780 = vsel %vm2779, %v2777, %v2774
      %v2781 = vadd.f32 %v2325, 1.0
      %v2782 = vlog2.pop %v2781
      %v2783 = vmul.f32 %v2782, 0.6931472
      %v2784 = vmul.f32 -0.5, %v2325
      %v2785 = vadd.f32 %v2784, 1.0
      %v2786 = vmul.f32 %v2785, %v2325
      %v2787 = vand.u32 2147483647, %v2325
      %vm2788 = vcmp.lt.f32.partialorder %v2787, 0.0004427343
      %v2789 = vsel %vm2788, %v2786, %v2783
      %v2790 = vadd.f32 %v2326, 1.0
      %v2791 = vlog2.pop %v2790
      %v2792 = vmul.f32 %v2791, 0.6931472
      %v2793 = vmul.f32 -0.5, %v2326
      %v2794 = vadd.f32 %v2793, 1.0
      %v2795 = vmul.f32 %v2794, %v2326
      %v2796 = vand.u32 2147483647, %v2326
      %vm2797 = vcmp.lt.f32.partialorder %v2796, 0.0004427343
      %v2798 = vsel %vm2797, %v2795, %v2792
      %v2799 = vadd.f32 %v2327, 1.0
      %v2800 = vlog2.pop %v2799
      %v2801 = vmul.f32 %v2800, 0.6931472
      %v2802 = vmul.f32 -0.5, %v2327
      %v2803 = vadd.f32 %v2802, 1.0
      %v2804 = vmul.f32 %v2803, %v2327
      %v2805 = vand.u32 2147483647, %v2327
      %vm2806 = vcmp.lt.f32.partialorder %v2805, 0.0004427343
      %v2807 = vsel %vm2806, %v2804, %v2801
      %v2808 = vadd.f32 %v2328, 1.0
      %v2809 = vlog2.pop %v2808
      %v2810 = vmul.f32 %v2809, 0.6931472
      %v2811 = vmul.f32 -0.5, %v2328
      %v2812 = vadd.f32 %v2811, 1.0
      %v2813 = vmul.f32 %v2812, %v2328
      %v2814 = vand.u32 2147483647, %v2328
      %vm2815 = vcmp.lt.f32.partialorder %v2814, 0.0004427343
      %v2816 = vsel %vm2815, %v2813, %v2810
      %v2817 = vadd.f32 %v2329, 1.0
      %v2818 = vlog2.pop %v2817
      %v2819 = vmul.f32 %v2818, 0.6931472
      %v2820 = vmul.f32 -0.5, %v2329
      %v2821 = vadd.f32 %v2820, 1.0
      %v2822 = vmul.f32 %v2821, %v2329
      %v2823 = vand.u32 2147483647, %v2329
      %vm2824 = vcmp.lt.f32.partialorder %v2823, 0.0004427343
      %v2825 = vsel %vm2824, %v2822, %v2819
      %v2826 = vadd.f32 %v2330, 1.0
      %v2827 = vlog2.pop %v2826
      %v2828 = vmul.f32 %v2827, 0.6931472
      %v2829 = vmul.f32 -0.5, %v2330
      %v2830 = vadd.f32 %v2829, 1.0
      %v2831 = vmul.f32 %v2830, %v2330
      %v2832 = vand.u32 2147483647, %v2330
      %vm2833 = vcmp.lt.f32.partialorder %v2832, 0.0004427343
      %v2834 = vsel %vm2833, %v2831, %v2828
      %v2835 = vadd.f32 %v2331, 1.0
      %v2836 = vlog2.pop %v2835
      %v2837 = vmul.f32 %v2836, 0.6931472
      %v2838 = vmul.f32 -0.5, %v2331
      %v2839 = vadd.f32 %v2838, 1.0
      %v2840 = vmul.f32 %v2839, %v2331
      %v2841 = vand.u32 2147483647, %v2331
      %vm2842 = vcmp.lt.f32.partialorder %v2841, 0.0004427343
      %v2843 = vsel %vm2842, %v2840, %v2837
      %v2844 = vadd.f32 %v2332, 1.0
      %v2845 = vlog2.pop %v2844
      %v2846 = vmul.f32 %v2845, 0.6931472
      %v2847 = vmul.f32 -0.5, %v2332
      %v2848 = vadd.f32 %v2847, 1.0
      %v2849 = vmul.f32 %v2848, %v2332
      %v2850 = vand.u32 2147483647, %v2332
      %vm2851 = vcmp.lt.f32.partialorder %v2850, 0.0004427343
      %v2852 = vsel %vm2851, %v2849, %v2846
      %v2853 = vadd.f32 %v2333, 1.0
      %v2854 = vlog2.pop %v2853
      %v2855 = vmul.f32 %v2854, 0.6931472
      %v2856 = vmul.f32 -0.5, %v2333
      %v2857 = vadd.f32 %v2856, 1.0
      %v2858 = vmul.f32 %v2857, %v2333
      %v2859 = vand.u32 2147483647, %v2333
      %vm2860 = vcmp.lt.f32.partialorder %v2859, 0.0004427343
      %v2861 = vsel %vm2860, %v2858, %v2855
      %v2862 = vadd.f32 %v2334, 1.0
      %v2863 = vlog2.pop %v2862
      %v2864 = vmul.f32 %v2863, 0.6931472
      %v2865 = vmul.f32 -0.5, %v2334
      %v2866 = vadd.f32 %v2865, 1.0
      %v2867 = vmul.f32 %v2866, %v2334
      %v2868 = vand.u32 2147483647, %v2334
      %vm2869 = vcmp.lt.f32.partialorder %v2868, 0.0004427343
      %v2870 = vsel %vm2869, %v2867, %v2864
      %v2871 = vadd.f32 %v2335, 1.0
      %v2872 = vlog2.pop %v2871
      %v2873 = vmul.f32 %v2872, 0.6931472
      %v2874 = vmul.f32 -0.5, %v2335
      %v2875 = vadd.f32 %v2874, 1.0
      %v2876 = vmul.f32 %v2875, %v2335
      %v2877 = vand.u32 2147483647, %v2335
      %vm2878 = vcmp.lt.f32.partialorder %v2877, 0.0004427343
      %v2879 = vsel %vm2878, %v2876, %v2873
      %v2880 = vadd.f32 %v2336, 1.0
      %v2881 = vlog2.pop %v2880
      %v2882 = vmul.f32 %v2881, 0.6931472
      %v2883 = vmul.f32 -0.5, %v2336
      %v2884 = vadd.f32 %v2883, 1.0
      %v2885 = vmul.f32 %v2884, %v2336
      %v2886 = vand.u32 2147483647, %v2336
      %vm2887 = vcmp.lt.f32.partialorder %v2886, 0.0004427343
      %v2888 = vsel %vm2887, %v2885, %v2882
      %v2889 = vadd.f32 %v2337, 1.0
      %v2890 = vlog2.pop %v2889
      %v2891 = vmul.f32 %v2890, 0.6931472
      %v2892 = vmul.f32 -0.5, %v2337
      %v2893 = vadd.f32 %v2892, 1.0
      %v2894 = vmul.f32 %v2893, %v2337
      %v2895 = vand.u32 2147483647, %v2337
      %vm2896 = vcmp.lt.f32.partialorder %v2895, 0.0004427343
      %v2897 = vsel %vm2896, %v2894, %v2891
      %v2898 = vadd.f32 %v2338, 1.0
      %v2899 = vlog2.pop %v2898
      %v2900 = vmul.f32 %v2899, 0.6931472
      %v2901 = vmul.f32 -0.5, %v2338
      %v2902 = vadd.f32 %v2901, 1.0
      %v2903 = vmul.f32 %v2902, %v2338
      %v2904 = vand.u32 2147483647, %v2338
      %vm2905 = vcmp.lt.f32.partialorder %v2904, 0.0004427343
      %v2906 = vsel %vm2905, %v2903, %v2900
      %v2907 = vadd.f32 %v2339, 1.0
      %v2908 = vlog2.pop %v2907
      %v2909 = vmul.f32 %v2908, 0.6931472
      %v2910 = vmul.f32 -0.5, %v2339
      %v2911 = vadd.f32 %v2910, 1.0
      %v2912 = vmul.f32 %v2911, %v2339
      %v2913 = vand.u32 2147483647, %v2339
      %vm2914 = vcmp.lt.f32.partialorder %v2913, 0.0004427343
      %v2915 = vsel %vm2914, %v2912, %v2909
      %v2916 = vadd.f32 %v2340, 1.0
      %v2917 = vlog2.pop %v2916
      %v2918 = vmul.f32 %v2917, 0.6931472
      %v2919 = vmul.f32 -0.5, %v2340
      %v2920 = vadd.f32 %v2919, 1.0
      %v2921 = vmul.f32 %v2920, %v2340
      %v2922 = vand.u32 2147483647, %v2340
      %vm2923 = vcmp.lt.f32.partialorder %v2922, 0.0004427343
      %v2924 = vsel %vm2923, %v2921, %v2918
      %v2925 = vadd.f32 %v2341, 1.0
      %v2926 = vlog2.pop %v2925
      %v2927 = vmul.f32 %v2926, 0.6931472
      %v2928 = vmul.f32 -0.5, %v2341
      %v2929 = vadd.f32 %v2928, 1.0
      %v2930 = vmul.f32 %v2929, %v2341
      %v2931 = vand.u32 2147483647, %v2341
      %vm2932 = vcmp.lt.f32.partialorder %v2931, 0.0004427343
      %v2933 = vsel %vm2932, %v2930, %v2927
      %v2934 = vadd.f32 %v2342, 1.0
      %v2935 = vlog2.pop %v2934
      %v2936 = vmul.f32 %v2935, 0.6931472
      %v2937 = vmul.f32 -0.5, %v2342
      %v2938 = vadd.f32 %v2937, 1.0
      %v2939 = vmul.f32 %v2938, %v2342
      %v2940 = vand.u32 2147483647, %v2342
      %vm2941 = vcmp.lt.f32.partialorder %v2940, 0.0004427343
      %v2942 = vsel %vm2941, %v2939, %v2936
      %v2943 = vadd.f32 %v2343, 1.0
      %v2944 = vlog2.pop %v2943
      %v2945 = vmul.f32 %v2944, 0.6931472
      %v2946 = vmul.f32 -0.5, %v2343
      %v2947 = vadd.f32 %v2946, 1.0
      %v2948 = vmul.f32 %v2947, %v2343
      %v2949 = vand.u32 2147483647, %v2343
      %vm2950 = vcmp.lt.f32.partialorder %v2949, 0.0004427343
      %v2951 = vsel %vm2950, %v2948, %v2945
      %v2952 = vadd.f32 %v2344, 1.0
      %v2953 = vlog2.pop %v2952
      %v2954 = vmul.f32 %v2953, 0.6931472
      %v2955 = vmul.f32 -0.5, %v2344
      %v2956 = vadd.f32 %v2955, 1.0
      %v2957 = vmul.f32 %v2956, %v2344
      %v2958 = vand.u32 2147483647, %v2344
      %vm2959 = vcmp.lt.f32.partialorder %v2958, 0.0004427343
      %v2960 = vsel %vm2959, %v2957, %v2954
      %2993 = vrot.lane.b32.xlu0 %v2681, 124
      %v2994 = vpop.permute.xlu0 %2993
      %2995 = vrot.lane.b32.xlu0 %v2690, 124
      %v2996 = vpop.permute.xlu0 %2995
      %2997 = vrot.lane.b32.xlu0 %v2699, 124
      %v2998 = vpop.permute.xlu0 %2997
      %2999 = vrot.lane.b32.xlu0 %v2708, 124
      %v3000 = vpop.permute.xlu0 %2999
      %3001 = vrot.lane.b32.xlu0 %v2717, 124
      %v3002 = vpop.permute.xlu0 %3001
      %3003 = vrot.lane.b32.xlu0 %v2726, 124
      %v3004 = vpop.permute.xlu0 %3003
      %3005 = vrot.lane.b32.xlu0 %v2735, 124
      %v3006 = vpop.permute.xlu0 %3005
      %3007 = vrot.lane.b32.xlu0 %v2744, 124
      %v3008 = vpop.permute.xlu0 %3007
      %3009 = vrot.lane.b32.xlu0 %v2753, 124
      %v3010 = vpop.permute.xlu0 %3009
      %3011 = vrot.lane.b32.xlu0 %v2762, 124
      %v3012 = vpop.permute.xlu0 %3011
      %3013 = vrot.lane.b32.xlu0 %v2771, 124
      %v3014 = vpop.permute.xlu0 %3013
      %3015 = vrot.lane.b32.xlu0 %v2780, 124
      %v3016 = vpop.permute.xlu0 %3015
      %3017 = vrot.lane.b32.xlu0 %v2789, 124
      %v3018 = vpop.permute.xlu0 %3017
      %3019 = vrot.lane.b32.xlu0 %v2798, 124
      %v3020 = vpop.permute.xlu0 %3019
      %3021 = vrot.lane.b32.xlu0 %v2807, 124
      %v3022 = vpop.permute.xlu0 %3021
      %3023 = vrot.lane.b32.xlu0 %v2816, 124
      %v3024 = vpop.permute.xlu0 %3023
      %3025 = vrot.lane.b32.xlu0 %v2825, 124
      %v3026 = vpop.permute.xlu0 %3025
      %3027 = vrot.lane.b32.xlu0 %v2834, 124
      %v3028 = vpop.permute.xlu0 %3027
      %3029 = vrot.lane.b32.xlu0 %v2843, 124
      %v3030 = vpop.permute.xlu0 %3029
      %3031 = vrot.lane.b32.xlu0 %v2852, 124
      %v3032 = vpop.permute.xlu0 %3031
      %3033 = vrot.lane.b32.xlu0 %v2861, 124
      %v3034 = vpop.permute.xlu0 %3033
      %3035 = vrot.lane.b32.xlu0 %v2870, 124
      %v3036 = vpop.permute.xlu0 %3035
      %3037 = vrot.lane.b32.xlu0 %v2879, 124
      %v3038 = vpop.permute.xlu0 %3037
      %3039 = vrot.lane.b32.xlu0 %v2888, 124
      %v3040 = vpop.permute.xlu0 %3039
      %3041 = vrot.lane.b32.xlu0 %v2897, 124
      %v3042 = vpop.permute.xlu0 %3041
      %3043 = vrot.lane.b32.xlu0 %v2906, 124
      %v3044 = vpop.permute.xlu0 %3043
      %3045 = vrot.lane.b32.xlu0 %v2915, 124
      %v3046 = vpop.permute.xlu0 %3045
      %3047 = vrot.lane.b32.xlu0 %v2924, 124
      %v3048 = vpop.permute.xlu0 %3047
      %3049 = vrot.lane.b32.xlu0 %v2933, 124
      %v3050 = vpop.permute.xlu0 %3049
      %3051 = vrot.lane.b32.xlu0 %v2942, 124
      %v3052 = vpop.permute.xlu0 %3051
      %3053 = vrot.lane.b32.xlu0 %v2951, 124
      %v3054 = vpop.permute.xlu0 %3053
      %3055 = vrot.lane.b32.xlu0 %v2960, 124
      %v3056 = vpop.permute.xlu0 %3055
      %v3089 = vsel %vm498, %v2994, 0.0
      %3090 = vadd.xlane.f32.xlu0 %v3089
      %v3091 = vpop.xlane.xlu0 %3090
      %v3092 = vsel %vm498, %v2996, 0.0
      %3093 = vadd.xlane.f32.xlu0 %v3092
      %v3094 = vpop.xlane.xlu0 %3093
      %v3095 = vsel %vm498, %v2998, 0.0
      %3096 = vadd.xlane.f32.xlu0 %v3095
      %v3097 = vpop.xlane.xlu0 %3096
      %v3098 = vsel %vm498, %v3000, 0.0
      %3099 = vadd.xlane.f32.xlu0 %v3098
      %v3100 = vpop.xlane.xlu0 %3099
      %v3101 = vsel %vm498, %v3002, 0.0
      %3102 = vadd.xlane.f32.xlu0 %v3101
      %v3103 = vpop.xlane.xlu0 %3102
      %v3104 = vsel %vm498, %v3004, 0.0
      %3105 = vadd.xlane.f32.xlu0 %v3104
      %v3106 = vpop.xlane.xlu0 %3105
      %v3107 = vsel %vm498, %v3006, 0.0
      %3108 = vadd.xlane.f32.xlu0 %v3107
      %v3109 = vpop.xlane.xlu0 %3108
      %v3110 = vsel %vm498, %v3008, 0.0
      %3111 = vadd.xlane.f32.xlu0 %v3110
      %v3112 = vpop.xlane.xlu0 %3111
      %v3113 = vsel %vm498, %v3010, 0.0
      %3114 = vadd.xlane.f32.xlu0 %v3113
      %v3115 = vpop.xlane.xlu0 %3114
      %v3116 = vsel %vm498, %v3012, 0.0
      %3117 = vadd.xlane.f32.xlu0 %v3116
      %v3118 = vpop.xlane.xlu0 %3117
      %v3119 = vsel %vm498, %v3014, 0.0
      %3120 = vadd.xlane.f32.xlu0 %v3119
      %v3121 = vpop.xlane.xlu0 %3120
      %v3122 = vsel %vm498, %v3016, 0.0
      %3123 = vadd.xlane.f32.xlu0 %v3122
      %v3124 = vpop.xlane.xlu0 %3123
      %v3125 = vsel %vm498, %v3018, 0.0
      %3126 = vadd.xlane.f32.xlu0 %v3125
      %v3127 = vpop.xlane.xlu0 %3126
      %v3128 = vsel %vm498, %v3020, 0.0
      %3129 = vadd.xlane.f32.xlu0 %v3128
      %v3130 = vpop.xlane.xlu0 %3129
      %v3131 = vsel %vm498, %v3022, 0.0
      %3132 = vadd.xlane.f32.xlu0 %v3131
      %v3133 = vpop.xlane.xlu0 %3132
      %v3134 = vsel %vm498, %v3024, 0.0
      %3135 = vadd.xlane.f32.xlu0 %v3134
      %v3136 = vpop.xlane.xlu0 %3135
      %v3137 = vsel %vm498, %v3026, 0.0
      %3138 = vadd.xlane.f32.xlu0 %v3137
      %v3139 = vpop.xlane.xlu0 %3138
      %v3140 = vsel %vm498, %v3028, 0.0
      %3141 = vadd.xlane.f32.xlu0 %v3140
      %v3142 = vpop.xlane.xlu0 %3141
      %v3143 = vsel %vm498, %v3030, 0.0
      %3144 = vadd.xlane.f32.xlu0 %v3143
      %v3145 = vpop.xlane.xlu0 %3144
      %v3146 = vsel %vm498, %v3032, 0.0
      %3147 = vadd.xlane.f32.xlu0 %v3146
      %v3148 = vpop.xlane.xlu0 %3147
      %v3149 = vsel %vm498, %v3034, 0.0
      %3150 = vadd.xlane.f32.xlu0 %v3149
      %v3151 = vpop.xlane.xlu0 %3150
      %v3152 = vsel %vm498, %v3036, 0.0
      %3153 = vadd.xlane.f32.xlu0 %v3152
      %v3154 = vpop.xlane.xlu0 %3153
      %v3155 = vsel %vm498, %v3038, 0.0
      %3156 = vadd.xlane.f32.xlu0 %v3155
      %v3157 = vpop.xlane.xlu0 %3156
      %v3158 = vsel %vm498, %v3040, 0.0
      %3159 = vadd.xlane.f32.xlu0 %v3158
      %v3160 = vpop.xlane.xlu0 %3159
      %v3161 = vsel %vm498, %v3042, 0.0
      %3162 = vadd.xlane.f32.xlu0 %v3161
      %v3163 = vpop.xlane.xlu0 %3162
      %v3164 = vsel %vm498, %v3044, 0.0
      %3165 = vadd.xlane.f32.xlu0 %v3164
      %v3166 = vpop.xlane.xlu0 %3165
      %v3167 = vsel %vm498, %v3046, 0.0
      %3168 = vadd.xlane.f32.xlu0 %v3167
      %v3169 = vpop.xlane.xlu0 %3168
      %v3170 = vsel %vm498, %v3048, 0.0
      %3171 = vadd.xlane.f32.xlu0 %v3170
      %v3172 = vpop.xlane.xlu0 %3171
      %v3173 = vsel %vm498, %v3050, 0.0
      %3174 = vadd.xlane.f32.xlu0 %v3173
      %v3175 = vpop.xlane.xlu0 %3174
      %v3176 = vsel %vm498, %v3052, 0.0
      %3177 = vadd.xlane.f32.xlu0 %v3176
      %v3178 = vpop.xlane.xlu0 %3177
      %v3179 = vsel %vm498, %v3054, 0.0
      %3180 = vadd.xlane.f32.xlu0 %v3179
      %v3181 = vpop.xlane.xlu0 %3180
      %v3182 = vsel %vm498, %v3056, 0.0
      %3183 = vadd.xlane.f32.xlu0 %v3182
      %v3184 = vpop.xlane.xlu0 %3183
      %vm3185 = vcmask 7168
      %3186 = vst.msk [vmem:[%s456] sm:$0xff] %vm3185, %v3091
      %3187 = vst.msk [vmem:[%s456 + $0x8] sm:$0xff] %vm3185, %v3094
      %3188 = vst.msk [vmem:[%s456 + $0x10] sm:$0xff] %vm3185, %v3097
      %3189 = vst.msk [vmem:[%s456 + $0x18] sm:$0xff] %vm3185, %v3100
      %3190 = vst.msk [vmem:[%s456 + $0x20] sm:$0xff] %vm3185, %v3103
      %3191 = vst.msk [vmem:[%s456 + $0x28] sm:$0xff] %vm3185, %v3106
      %3192 = vst.msk [vmem:[%s456 + $0x30] sm:$0xff] %vm3185, %v3109
      %3193 = vst.msk [vmem:[%s456 + $0x38] sm:$0xff] %vm3185, %v3112
      %3194 = vst.msk [vmem:[%s456 + $0x40] sm:$0xff] %vm3185, %v3115
      %3195 = vst.msk [vmem:[%s456 + $0x48] sm:$0xff] %vm3185, %v3118
      %3196 = vst.msk [vmem:[%s456 + $0x50] sm:$0xff] %vm3185, %v3121
      %3197 = vst.msk [vmem:[%s456 + $0x58] sm:$0xff] %vm3185, %v3124
      %3198 = vst.msk [vmem:[%s456 + $0x60] sm:$0xff] %vm3185, %v3127
      %3199 = vst.msk [vmem:[%s456 + $0x68] sm:$0xff] %vm3185, %v3130
      %3200 = vst.msk [vmem:[%s456 + $0x70] sm:$0xff] %vm3185, %v3133
      %3201 = vst.msk [vmem:[%s456 + $0x78] sm:$0xff] %vm3185, %v3136
      %3202 = vst.msk [vmem:[%s456 + $0x80] sm:$0xff] %vm3185, %v3139
      %3203 = vst.msk [vmem:[%s456 + $0x88] sm:$0xff] %vm3185, %v3142
      %3204 = vst.msk [vmem:[%s456 + $0x90] sm:$0xff] %vm3185, %v3145
      %3205 = vst.msk [vmem:[%s456 + $0x98] sm:$0xff] %vm3185, %v3148
      %3206 = vst.msk [vmem:[%s456 + $0xa0] sm:$0xff] %vm3185, %v3151
      %3207 = vst.msk [vmem:[%s456 + $0xa8] sm:$0xff] %vm3185, %v3154
      %3208 = vst.msk [vmem:[%s456 + $0xb0] sm:$0xff] %vm3185, %v3157
      %3209 = vst.msk [vmem:[%s456 + $0xb8] sm:$0xff] %vm3185, %v3160
      %3210 = vst.msk [vmem:[%s456 + $0xc0] sm:$0xff] %vm3185, %v3163
      %3211 = vst.msk [vmem:[%s456 + $0xc8] sm:$0xff] %vm3185, %v3166
      %3212 = vst.msk [vmem:[%s456 + $0xd0] sm:$0xff] %vm3185, %v3169
      %3213 = vst.msk [vmem:[%s456 + $0xd8] sm:$0xff] %vm3185, %v3172
      %3214 = vst.msk [vmem:[%s456 + $0xe0] sm:$0xff] %vm3185, %v3175
      %3215 = vst.msk [vmem:[%s456 + $0xe8] sm:$0xff] %vm3185, %v3178
      %3216 = vst.msk [vmem:[%s456 + $0xf0] sm:$0xff] %vm3185, %v3181
      %3217 = vst.msk [vmem:[%s456 + $0xf8] sm:$0xff] %vm3185, %v3184
      %s3218 = smul.u32 32, %s25
      %p3219 = scmp.lt.s32.totalorder %s3218, 63
      %s3220 = scalar_select %p3219, %s3218, 63
      %s3221 = smul.addr %s3220, 8
      %s3222 = scalar_lea.vmem %s12, %s3221
      %s3223 = smul.u32 32, %s25
      %p3224 = scmp.lt.s32.totalorder %s3223, 63
      %s3225 = scalar_select %p3224, %s3223, 63
      %s3226 = smul.addr %s3225, 8
      %s3227 = scalar_lea.vmem %s13, %s3226
      // Predicated region
      $region69: #{tpu_custom_call.1} parent=67 // pred_check
        %p3228 = pneg %p300
      $region70: #{tpu_custom_call.1} parent=67 // pred_check_branch
        %3230 = sbr.rel (%p3228) target = $region72
      $region71: #{tpu_custom_call.1} parent=67 // pred_region
        %s3231 = smul.u32 32, %s25
      $region72: #{tpu_custom_call.1} parent=67 // pred_fallthru
        _
      // Predicated region
      $region73: #{tpu_custom_call.1} parent=67 // pred_check
        %p3232 = pneg %p326
      $region74: #{tpu_custom_call.1} parent=67 // pred_check_branch
        %3234 = sbr.rel (%p3232) target = $region76
      $region75: #{tpu_custom_call.1} parent=67 // pred_region
        %s3235 = smul.u32 32, %s25
      $region76: #{tpu_custom_call.1} parent=67 // pred_fallthru
        _
    $region68: #{tpu_custom_call.1} parent=5 // pred_fallthru
      _
    %p3236 = scmp.le.s32.totalorder 2, %s20
    // Predicated region
    $region77: #{tpu_custom_call.1} parent=5 // pred_check
      %p3237 = pneg %p3236
    $region78: #{tpu_custom_call.1} parent=5 // pred_check_branch
      %3239 = sbr.rel (%p3237) target = $region80
    $region79: #{tpu_custom_call.1} parent=5 // pred_region
      %s3240 = ssub.s32 %s20, 2
      // Predicated region
      $region81: #{tpu_custom_call.1} parent=79 // pred_check
        %p3241 = pneg %p306
      $region82: #{tpu_custom_call.1} parent=79 // pred_check_branch
        %3243 = sbr.rel (%p3241) target = $region84
      $region83: #{tpu_custom_call.1} parent=79 // pred_region
        %s3244 = smul.u32 32, %s26
        %p3245 = scmp.lt.s32.totalorder %s3244, 63
        %s3246 = scalar_select %p3245, %s3244, 63
        %s3247 = smul.addr %s3246, 8
        %s3248 = scalar_lea.vmem %s12, %s3247
      $region84: #{tpu_custom_call.1} parent=79 // pred_fallthru
        _
      // Predicated region
      $region85: #{tpu_custom_call.1} parent=79 // pred_check
        %p3249 = pneg %p332
      $region86: #{tpu_custom_call.1} parent=79 // pred_check_branch
        %3251 = sbr.rel (%p3249) target = $region88
      $region87: #{tpu_custom_call.1} parent=79 // pred_region
        %s3252 = smul.u32 32, %s26
        %p3253 = scmp.lt.s32.totalorder %s3252, 63
        %s3254 = scalar_select %p3253, %s3252, 63
        %s3255 = smul.addr %s3254, 8
        %s3256 = scalar_lea.vmem %s13, %s3255
      $region88: #{tpu_custom_call.1} parent=79 // pred_fallthru
        _
    $region80: #{tpu_custom_call.1} parent=5 // pred_fallthru
      _
  $region6: #{tpu_custom_call.1} parent=0 // loop_footer
    %s24 = sadd.s32 1, %s20
  $region7: #{tpu_custom_call.1} parent=0 // loop_footer_branch
    %19 = sbr.rel target = $region3
  $region8: #{tpu_custom_call.1} parent=0 // loop_exit
    _

</llo_original>
